<compile_context>
chip_gen: v5e
topology: v5e:2x2
jax: 0.10.0
libtpu: 0.0.40
codegen_flags: <defaults>
</compile_context>

<pallas_src>
import itertools
import numpy as np
import jax
import jax.numpy as jnp
from jax import lax
from jax.experimental import pallas as pl
from jax.experimental.pallas import tpu as pltpu


def library_dim(latent_dim, poly_order, include_sine):
    l = 1 + latent_dim
    for k in range(2, poly_order + 1):
        l += len(list(itertools.combinations_with_replacement(range(latent_dim), k)))
    if include_sine:
        l += latent_dim
    return l


# ----------------------------------------------------------------------------
# Pallas kernel factory
# ----------------------------------------------------------------------------
def make_sindy_forward(latent_dim, poly_order, include_sine, block_n=2048):
    D = latent_dim
    lib_dim = library_dim(latent_dim, poly_order, include_sine)
    # Contract last dim of lhs with last dim of rhs (A @ B^T), i.e. the same
    # "NT" dimension numbers used for q @ k^T in the official flash kernel.
    NT_DIMS = (((1,), (1,)), ((), ()))

    def kernel(h_ref, cT_ref, out_ref):
        h_nd = h_ref[...]            # (TN, D)   native layout tile
        cT = cT_ref[...]             # (D, lib)  mask & dt already folded in

        # Lane-dense transpose of the tile via an exact identity contraction on
        # the (idle) MXU: hT = eye @ h_nd^T  -> (D, TN).
        ii = lax.broadcasted_iota(jnp.int32, (D, D), 0)
        jj = lax.broadcasted_iota(jnp.int32, (D, D), 1)
        eye = (ii == jj).astype(jnp.float32)
        hT = lax.dot_general(eye, h_nd, NT_DIMS,
                             preferred_element_type=jnp.float32)      # (D, TN)

        # Linear terms (one small NT contraction) + constant term as a bias.
        delta = lax.dot_general(cT[:, 1:1 + D], h_nd, NT_DIMS,
                                preferred_element_type=jnp.float32)   # (D, TN)
        delta = delta + cT[:, 0:1]                                    # constant
        off = 1 + D

        # Polynomial terms, order k = 2..poly_order.  Ordering matches the
        # reference nested i <= j <= ... loops (combinations_with_replacement):
        # for each fixed prefix the last index runs prefix[-1]..D-1 as one block.
        for k in range(2, poly_order + 1):
            for prefix in itertools.combinations_with_replacement(range(D), k - 1):
                j = prefix[-1]
                w = D - j
                blk = hT[j:D, :]                                      # (w, TN)
                for idx in prefix:
                    blk = blk * hT[idx:idx + 1, :]
                if w == 1:
                    # outer product: cheap VPU broadcast, avoids a K=1 matmul
                    delta = delta + cT[:, off:off + 1] * blk
                else:
                    delta = delta + jnp.dot(cT[:, off:off + w], blk,
                                            preferred_element_type=jnp.float32)
                off += w

        if include_sine:
            delta = delta + jnp.dot(cT[:, off:off + D], jnp.sin(hT),
                                    preferred_element_type=jnp.float32)
            off += D
        assert off == lib_dim  # trace-time sanity check

        # Lane-dense output tile -> unmasked full-width vector stores.
        out_ref[...] = hT + delta

    def forward(h, dt, coefficients, coefficient_mask):
        # h: (num_data, latent_dim); coefficients/mask: (library_dim, latent_dim)
        h = jnp.asarray(h, jnp.float32)
        N, d = h.shape
        assert d == D
        assert coefficients.shape == (lib_dim, D)
        assert coefficient_mask.shape == (lib_dim, D)

        # Fold mask (first, so masked entries stay exactly 0) and dt once.
        c_eff = (jnp.asarray(coefficients, jnp.float32)
                 * jnp.asarray(coefficient_mask, jnp.float32)) * jnp.float32(dt)
        cT = jnp.transpose(c_eff)                        # (D, lib_dim), tiny

        # Tile width: multiple of 128, never exceeding N, so only the trailing
        # block is partial (Pallas clips both the input read and output write).
        # Sweep block_n per generation; 2048 is safe on v5e/v6e/v7x defaults.
        if N >= 128:
            tn = min(block_n, (N // 128) * 128)
        else:
            tn = N
        grid = (pl.cdiv(N, tn),)

        # Advisory cost estimate so XLA can schedule neighbours around the call.
        n_poly_mults = 0
        for k in range(2, poly_order + 1):
            for prefix in itertools.combinations_with_replacement(range(D), k - 1):
                n_poly_mults += (k - 1) * (D - prefix[-1])
        flops = N * (2 * D * D + 2 * D * lib_dim + n_poly_mults + D)
        ce = pl.CostEstimate(
            flops=int(flops),
            transcendentals=int(D * N if include_sine else 0),
            bytes_accessed=int(2 * 4 * D * N + 4 * D * lib_dim))

        out_T = pl.pallas_call(
            kernel,
            grid=grid,
            in_specs=[
                pl.BlockSpec((tn, D), lambda i: (i, 0)),        # native h tile
                pl.BlockSpec((D, lib_dim), lambda i: (0, 0)),   # folded coeffs
            ],
            out_specs=pl.BlockSpec((D, tn), lambda i: (0, i)),  # lane-dense out
            out_shape=jax.ShapeDtypeStruct((D, N), jnp.float32),
            compiler_params=pltpu.CompilerParams(
                dimension_semantics=("parallel",)),
            cost_estimate=ce,
        )(h, cT)

        # TODO(synk): keep (D, N) end-to-end in the caller to drop this too.
        return jnp.transpose(out_T)                       # (N, D)

    return forward


# ----------------------------------------------------------------------------
# Pure-JAX reference (mirrors sindy_library_torch + SINDy.forward exactly)
# ----------------------------------------------------------------------------
def _sindy_library_ref(z, latent_dim, poly_order, include_sine):
    cols = [jnp.ones((z.shape[0],), z.dtype)]
    for i in range(latent_dim):
        cols.append(z[:, i])
    for k in range(2, poly_order + 1):
        for combo in itertools.combinations_with_replacement(range(latent_dim), k):
            c = z[:, combo[0]]
            for idx in combo[1:]:
                c = c * z[:, idx]
            cols.append(c)
    if include_sine:
        for i in range(latent_dim):
            cols.append(jnp.sin(z[:, i]))
    return jnp.stack(cols, axis=1)


def _forward_ref(h, dt, coeffs, mask, latent_dim, poly_order, include_sine):
    theta = _sindy_library_ref(h, latent_dim, poly_order, include_sine)
    return h + theta @ (coeffs * mask) * dt


# ----------------------------------------------------------------------------
if __name__ == "__main__":
    num_data = 1000            # exercises a 4-step "parallel" grid + a partial last block
    latent_dim = 6
    poly_order = 3
    include_sine = True
    dt = 0.01

    lib_dim = library_dim(latent_dim, poly_order, include_sine)  # 1+6+21+56+6 = 90

    key = jax.random.PRNGKey(0)
    k_h, k_c = jax.random.split(key)
    h = jax.random.normal(k_h, (num_data, latent_dim), dtype=jnp.float32)
    # torch.nn.init.normal_(coefficients, mean=0.0, std=0.001)
    coefficients = 0.001 * jax.random.normal(
        k_c, (lib_dim, latent_dim), dtype=jnp.float32)
    # exercise the masking path (as after SINDy.thresholding)
    coefficient_mask = (jnp.abs(coefficients) > 5e-4).astype(jnp.float32)

    forward = make_sindy_forward(latent_dim, poly_order, include_sine, block_n=256)
    out = forward(h, dt, coefficients, coefficient_mask)
    out = jax.block_until_ready(out)

    ref = _forward_ref(h, dt, coefficients, coefficient_mask,
                       latent_dim, poly_order, include_sine)
    ref = jax.block_until_ready(ref)

    np.testing.assert_allclose(np.asarray(out), np.asarray(ref),
                               rtol=1e-5, atol=1e-6)
    print("KERNEL_OK")
</pallas_src>

<mosaic_0001>
module attributes {stable_mosaic.version = 11 : i64} {
  func.func @kernel(%arg0: i32, %arg1: memref<256x6xf32, #tpu.memory_space<vmem>>, %arg2: memref<6x90xf32, #tpu.memory_space<vmem>>, %arg3: memref<6x256xf32, #tpu.memory_space<vmem>>) attributes {dimension_semantics = [#tpu.dimension_semantics<parallel>], iteration_bounds = array<i64: 4>, scalar_prefetch = 0 : i64, scratch_operands = 0 : i64, tpu.core_type = #tpu.core_type<tc>, window_params = [{transform_indices = @transform_0, window_bounds = array<i64: 256, 6>}, {pipeline_mode = #tpu.pipeline_mode<synchronous>, transform_indices = @transform_1, window_bounds = array<i64: 6, 90>}, {transform_indices = @transform_2, window_bounds = array<i64: 6, 256>}]} {
    %c0 = arith.constant 0 : index
    %c0_0 = arith.constant 0 : index
    %0 = vector.load %arg1[%c0, %c0_0] : memref<256x6xf32, #tpu.memory_space<vmem>>, vector<256x6xf32>
    %c0_1 = arith.constant 0 : index
    %c0_2 = arith.constant 0 : index
    %1 = vector.load %arg2[%c0_1, %c0_2] : memref<6x90xf32, #tpu.memory_space<vmem>>, vector<6x90xf32>
    %2 = tpu.iota {dimensions = array<i32: 0>} : vector<6x6xi32>
    %3 = tpu.iota {dimensions = array<i32: 1>} : vector<6x6xi32>
    %4 = arith.cmpi eq, %2, %3 : vector<6x6xi32>
    %5 = arith.extui %4 : vector<6x6xi1> to vector<6x6xi32>
    %6 = arith.sitofp %5 : vector<6x6xi32> to vector<6x6xf32>
    %cst = arith.constant dense<0.000000e+00> : vector<6x256xf32>
    %7 = tpu.matmul %6, %0, %cst {dimension_numbers = #tpu.dot_dimension_numbers<[1], [1], [0], [0], [0, 0, 1, 0], [], []>} : vector<6x6xf32>, vector<256x6xf32>, vector<6x256xf32> -> vector<6x256xf32>
    %8 = vector.extract_strided_slice %1 {offsets = [0, 1], sizes = [6, 6], strides = [1, 1]} : vector<6x90xf32> to vector<6x6xf32>
    %cst_3 = arith.constant dense<0.000000e+00> : vector<6x256xf32>
    %9 = tpu.matmul %8, %0, %cst_3 {dimension_numbers = #tpu.dot_dimension_numbers<[1], [1], [0], [0], [0, 0, 1, 0], [], []>} : vector<6x6xf32>, vector<256x6xf32>, vector<6x256xf32> -> vector<6x256xf32>
    %10 = vector.extract_strided_slice %1 {offsets = [0, 0], sizes = [6, 1], strides = [1, 1]} : vector<6x90xf32> to vector<6x1xf32>
    %11 = vector.broadcast %10 : vector<6x1xf32> to vector<6x256xf32>
    %12 = arith.addf %9, %11 : vector<6x256xf32>
    %13 = vector.extract_strided_slice %7 {offsets = [0, 0], sizes = [1, 256], strides = [1, 1]} : vector<6x256xf32> to vector<1x256xf32>
    %14 = vector.broadcast %13 : vector<1x256xf32> to vector<6x256xf32>
    %15 = arith.mulf %7, %14 : vector<6x256xf32>
    %16 = vector.extract_strided_slice %1 {offsets = [0, 7], sizes = [6, 6], strides = [1, 1]} : vector<6x90xf32> to vector<6x6xf32>
    %cst_4 = arith.constant dense<0.000000e+00> : vector<6x256xf32>
    %17 = tpu.matmul %16, %15, %cst_4 {dimension_numbers = #tpu.dot_dimension_numbers<[1], [0], [0], [1], [0, 0, 1, 1], [], []>} : vector<6x6xf32>, vector<6x256xf32>, vector<6x256xf32> -> vector<6x256xf32>
    %18 = arith.addf %12, %17 : vector<6x256xf32>
    %19 = vector.extract_strided_slice %7 {offsets = [1, 0], sizes = [5, 256], strides = [1, 1]} : vector<6x256xf32> to vector<5x256xf32>
    %20 = vector.extract_strided_slice %7 {offsets = [1, 0], sizes = [1, 256], strides = [1, 1]} : vector<6x256xf32> to vector<1x256xf32>
    %21 = vector.broadcast %20 : vector<1x256xf32> to vector<5x256xf32>
    %22 = arith.mulf %19, %21 : vector<5x256xf32>
    %23 = vector.extract_strided_slice %1 {offsets = [0, 13], sizes = [6, 5], strides = [1, 1]} : vector<6x90xf32> to vector<6x5xf32>
    %cst_5 = arith.constant dense<0.000000e+00> : vector<6x256xf32>
    %24 = tpu.matmul %23, %22, %cst_5 {dimension_numbers = #tpu.dot_dimension_numbers<[1], [0], [0], [1], [0, 0, 1, 1], [], []>} : vector<6x5xf32>, vector<5x256xf32>, vector<6x256xf32> -> vector<6x256xf32>
    %25 = arith.addf %18, %24 : vector<6x256xf32>
    %26 = vector.extract_strided_slice %7 {offsets = [2, 0], sizes = [4, 256], strides = [1, 1]} : vector<6x256xf32> to vector<4x256xf32>
    %27 = vector.extract_strided_slice %7 {offsets = [2, 0], sizes = [1, 256], strides = [1, 1]} : vector<6x256xf32> to vector<1x256xf32>
    %28 = vector.broadcast %27 : vector<1x256xf32> to vector<4x256xf32>
    %29 = arith.mulf %26, %28 : vector<4x256xf32>
    %30 = vector.extract_strided_slice %1 {offsets = [0, 18], sizes = [6, 4], strides = [1, 1]} : vector<6x90xf32> to vector<6x4xf32>
    %cst_6 = arith.constant dense<0.000000e+00> : vector<6x256xf32>
    %31 = tpu.matmul %30, %29, %cst_6 {dimension_numbers = #tpu.dot_dimension_numbers<[1], [0], [0], [1], [0, 0, 1, 1], [], []>} : vector<6x4xf32>, vector<4x256xf32>, vector<6x256xf32> -> vector<6x256xf32>
    %32 = arith.addf %25, %31 : vector<6x256xf32>
    %33 = vector.extract_strided_slice %7 {offsets = [3, 0], sizes = [3, 256], strides = [1, 1]} : vector<6x256xf32> to vector<3x256xf32>
    %34 = vector.extract_strided_slice %7 {offsets = [3, 0], sizes = [1, 256], strides = [1, 1]} : vector<6x256xf32> to vector<1x256xf32>
    %35 = vector.broadcast %34 : vector<1x256xf32> to vector<3x256xf32>
    %36 = arith.mulf %33, %35 : vector<3x256xf32>
    %37 = vector.extract_strided_slice %1 {offsets = [0, 22], sizes = [6, 3], strides = [1, 1]} : vector<6x90xf32> to vector<6x3xf32>
    %cst_7 = arith.constant dense<0.000000e+00> : vector<6x256xf32>
    %38 = tpu.matmul %37, %36, %cst_7 {dimension_numbers = #tpu.dot_dimension_numbers<[1], [0], [0], [1], [0, 0, 1, 1], [], []>} : vector<6x3xf32>, vector<3x256xf32>, vector<6x256xf32> -> vector<6x256xf32>
    %39 = arith.addf %32, %38 : vector<6x256xf32>
    %40 = vector.extract_strided_slice %7 {offsets = [4, 0], sizes = [2, 256], strides = [1, 1]} : vector<6x256xf32> to vector<2x256xf32>
    %41 = vector.extract_strided_slice %7 {offsets = [4, 0], sizes = [1, 256], strides = [1, 1]} : vector<6x256xf32> to vector<1x256xf32>
    %42 = vector.broadcast %41 : vector<1x256xf32> to vector<2x256xf32>
    %43 = arith.mulf %40, %42 : vector<2x256xf32>
    %44 = vector.extract_strided_slice %1 {offsets = [0, 25], sizes = [6, 2], strides = [1, 1]} : vector<6x90xf32> to vector<6x2xf32>
    %cst_8 = arith.constant dense<0.000000e+00> : vector<6x256xf32>
    %45 = tpu.matmul %44, %43, %cst_8 {dimension_numbers = #tpu.dot_dimension_numbers<[1], [0], [0], [1], [0, 0, 1, 1], [], []>} : vector<6x2xf32>, vector<2x256xf32>, vector<6x256xf32> -> vector<6x256xf32>
    %46 = arith.addf %39, %45 : vector<6x256xf32>
    %47 = vector.extract_strided_slice %7 {offsets = [5, 0], sizes = [1, 256], strides = [1, 1]} : vector<6x256xf32> to vector<1x256xf32>
    %48 = vector.extract_strided_slice %7 {offsets = [5, 0], sizes = [1, 256], strides = [1, 1]} : vector<6x256xf32> to vector<1x256xf32>
    %49 = arith.mulf %47, %48 : vector<1x256xf32>
    %50 = vector.extract_strided_slice %1 {offsets = [0, 27], sizes = [6, 1], strides = [1, 1]} : vector<6x90xf32> to vector<6x1xf32>
    %51 = vector.broadcast %50 : vector<6x1xf32> to vector<6x256xf32>
    %52 = vector.broadcast %49 : vector<1x256xf32> to vector<6x256xf32>
    %53 = arith.mulf %51, %52 : vector<6x256xf32>
    %54 = arith.addf %46, %53 : vector<6x256xf32>
    %55 = vector.extract_strided_slice %7 {offsets = [0, 0], sizes = [1, 256], strides = [1, 1]} : vector<6x256xf32> to vector<1x256xf32>
    %56 = vector.broadcast %55 : vector<1x256xf32> to vector<6x256xf32>
    %57 = arith.mulf %7, %56 : vector<6x256xf32>
    %58 = vector.extract_strided_slice %7 {offsets = [0, 0], sizes = [1, 256], strides = [1, 1]} : vector<6x256xf32> to vector<1x256xf32>
    %59 = vector.broadcast %58 : vector<1x256xf32> to vector<6x256xf32>
    %60 = arith.mulf %57, %59 : vector<6x256xf32>
    %61 = vector.extract_strided_slice %1 {offsets = [0, 28], sizes = [6, 6], strides = [1, 1]} : vector<6x90xf32> to vector<6x6xf32>
    %cst_9 = arith.constant dense<0.000000e+00> : vector<6x256xf32>
    %62 = tpu.matmul %61, %60, %cst_9 {dimension_numbers = #tpu.dot_dimension_numbers<[1], [0], [0], [1], [0, 0, 1, 1], [], []>} : vector<6x6xf32>, vector<6x256xf32>, vector<6x256xf32> -> vector<6x256xf32>
    %63 = arith.addf %54, %62 : vector<6x256xf32>
    %64 = vector.extract_strided_slice %7 {offsets = [1, 0], sizes = [5, 256], strides = [1, 1]} : vector<6x256xf32> to vector<5x256xf32>
    %65 = vector.extract_strided_slice %7 {offsets = [0, 0], sizes = [1, 256], strides = [1, 1]} : vector<6x256xf32> to vector<1x256xf32>
    %66 = vector.broadcast %65 : vector<1x256xf32> to vector<5x256xf32>
    %67 = arith.mulf %64, %66 : vector<5x256xf32>
    %68 = vector.extract_strided_slice %7 {offsets = [1, 0], sizes = [1, 256], strides = [1, 1]} : vector<6x256xf32> to vector<1x256xf32>
    %69 = vector.broadcast %68 : vector<1x256xf32> to vector<5x256xf32>
    %70 = arith.mulf %67, %69 : vector<5x256xf32>
    %71 = vector.extract_strided_slice %1 {offsets = [0, 34], sizes = [6, 5], strides = [1, 1]} : vector<6x90xf32> to vector<6x5xf32>
    %cst_10 = arith.constant dense<0.000000e+00> : vector<6x256xf32>
    %72 = tpu.matmul %71, %70, %cst_10 {dimension_numbers = #tpu.dot_dimension_numbers<[1], [0], [0], [1], [0, 0, 1, 1], [], []>} : vector<6x5xf32>, vector<5x256xf32>, vector<6x256xf32> -> vector<6x256xf32>
    %73 = arith.addf %63, %72 : vector<6x256xf32>
    %74 = vector.extract_strided_slice %7 {offsets = [2, 0], sizes = [4, 256], strides = [1, 1]} : vector<6x256xf32> to vector<4x256xf32>
    %75 = vector.extract_strided_slice %7 {offsets = [0, 0], sizes = [1, 256], strides = [1, 1]} : vector<6x256xf32> to vector<1x256xf32>
    %76 = vector.broadcast %75 : vector<1x256xf32> to vector<4x256xf32>
    %77 = arith.mulf %74, %76 : vector<4x256xf32>
    %78 = vector.extract_strided_slice %7 {offsets = [2, 0], sizes = [1, 256], strides = [1, 1]} : vector<6x256xf32> to vector<1x256xf32>
    %79 = vector.broadcast %78 : vector<1x256xf32> to vector<4x256xf32>
    %80 = arith.mulf %77, %79 : vector<4x256xf32>
    %81 = vector.extract_strided_slice %1 {offsets = [0, 39], sizes = [6, 4], strides = [1, 1]} : vector<6x90xf32> to vector<6x4xf32>
    %cst_11 = arith.constant dense<0.000000e+00> : vector<6x256xf32>
    %82 = tpu.matmul %81, %80, %cst_11 {dimension_numbers = #tpu.dot_dimension_numbers<[1], [0], [0], [1], [0, 0, 1, 1], [], []>} : vector<6x4xf32>, vector<4x256xf32>, vector<6x256xf32> -> vector<6x256xf32>
    %83 = arith.addf %73, %82 : vector<6x256xf32>
    %84 = vector.extract_strided_slice %7 {offsets = [3, 0], sizes = [3, 256], strides = [1, 1]} : vector<6x256xf32> to vector<3x256xf32>
    %85 = vector.extract_strided_slice %7 {offsets = [0, 0], sizes = [1, 256], strides = [1, 1]} : vector<6x256xf32> to vector<1x256xf32>
    %86 = vector.broadcast %85 : vector<1x256xf32> to vector<3x256xf32>
    %87 = arith.mulf %84, %86 : vector<3x256xf32>
    %88 = vector.extract_strided_slice %7 {offsets = [3, 0], sizes = [1, 256], strides = [1, 1]} : vector<6x256xf32> to vector<1x256xf32>
    %89 = vector.broadcast %88 : vector<1x256xf32> to vector<3x256xf32>
    %90 = arith.mulf %87, %89 : vector<3x256xf32>
    %91 = vector.extract_strided_slice %1 {offsets = [0, 43], sizes = [6, 3], strides = [1, 1]} : vector<6x90xf32> to vector<6x3xf32>
    %cst_12 = arith.constant dense<0.000000e+00> : vector<6x256xf32>
    %92 = tpu.matmul %91, %90, %cst_12 {dimension_numbers = #tpu.dot_dimension_numbers<[1], [0], [0], [1], [0, 0, 1, 1], [], []>} : vector<6x3xf32>, vector<3x256xf32>, vector<6x256xf32> -> vector<6x256xf32>
    %93 = arith.addf %83, %92 : vector<6x256xf32>
    %94 = vector.extract_strided_slice %7 {offsets = [4, 0], sizes = [2, 256], strides = [1, 1]} : vector<6x256xf32> to vector<2x256xf32>
    %95 = vector.extract_strided_slice %7 {offsets = [0, 0], sizes = [1, 256], strides = [1, 1]} : vector<6x256xf32> to vector<1x256xf32>
    %96 = vector.broadcast %95 : vector<1x256xf32> to vector<2x256xf32>
    %97 = arith.mulf %94, %96 : vector<2x256xf32>
    %98 = vector.extract_strided_slice %7 {offsets = [4, 0], sizes = [1, 256], strides = [1, 1]} : vector<6x256xf32> to vector<1x256xf32>
    %99 = vector.broadcast %98 : vector<1x256xf32> to vector<2x256xf32>
    %100 = arith.mulf %97, %99 : vector<2x256xf32>
    %101 = vector.extract_strided_slice %1 {offsets = [0, 46], sizes = [6, 2], strides = [1, 1]} : vector<6x90xf32> to vector<6x2xf32>
    %cst_13 = arith.constant dense<0.000000e+00> : vector<6x256xf32>
    %102 = tpu.matmul %101, %100, %cst_13 {dimension_numbers = #tpu.dot_dimension_numbers<[1], [0], [0], [1], [0, 0, 1, 1], [], []>} : vector<6x2xf32>, vector<2x256xf32>, vector<6x256xf32> -> vector<6x256xf32>
    %103 = arith.addf %93, %102 : vector<6x256xf32>
    %104 = vector.extract_strided_slice %7 {offsets = [5, 0], sizes = [1, 256], strides = [1, 1]} : vector<6x256xf32> to vector<1x256xf32>
    %105 = vector.extract_strided_slice %7 {offsets = [0, 0], sizes = [1, 256], strides = [1, 1]} : vector<6x256xf32> to vector<1x256xf32>
    %106 = arith.mulf %104, %105 : vector<1x256xf32>
    %107 = vector.extract_strided_slice %7 {offsets = [5, 0], sizes = [1, 256], strides = [1, 1]} : vector<6x256xf32> to vector<1x256xf32>
    %108 = arith.mulf %106, %107 : vector<1x256xf32>
    %109 = vector.extract_strided_slice %1 {offsets = [0, 48], sizes = [6, 1], strides = [1, 1]} : vector<6x90xf32> to vector<6x1xf32>
    %110 = vector.broadcast %109 : vector<6x1xf32> to vector<6x256xf32>
    %111 = vector.broadcast %108 : vector<1x256xf32> to vector<6x256xf32>
    %112 = arith.mulf %110, %111 : vector<6x256xf32>
    %113 = arith.addf %103, %112 : vector<6x256xf32>
    %114 = vector.extract_strided_slice %7 {offsets = [1, 0], sizes = [5, 256], strides = [1, 1]} : vector<6x256xf32> to vector<5x256xf32>
    %115 = vector.extract_strided_slice %7 {offsets = [1, 0], sizes = [1, 256], strides = [1, 1]} : vector<6x256xf32> to vector<1x256xf32>
    %116 = vector.broadcast %115 : vector<1x256xf32> to vector<5x256xf32>
    %117 = arith.mulf %114, %116 : vector<5x256xf32>
    %118 = vector.extract_strided_slice %7 {offsets = [1, 0], sizes = [1, 256], strides = [1, 1]} : vector<6x256xf32> to vector<1x256xf32>
    %119 = vector.broadcast %118 : vector<1x256xf32> to vector<5x256xf32>
    %120 = arith.mulf %117, %119 : vector<5x256xf32>
    %121 = vector.extract_strided_slice %1 {offsets = [0, 49], sizes = [6, 5], strides = [1, 1]} : vector<6x90xf32> to vector<6x5xf32>
    %cst_14 = arith.constant dense<0.000000e+00> : vector<6x256xf32>
    %122 = tpu.matmul %121, %120, %cst_14 {dimension_numbers = #tpu.dot_dimension_numbers<[1], [0], [0], [1], [0, 0, 1, 1], [], []>} : vector<6x5xf32>, vector<5x256xf32>, vector<6x256xf32> -> vector<6x256xf32>
    %123 = arith.addf %113, %122 : vector<6x256xf32>
    %124 = vector.extract_strided_slice %7 {offsets = [2, 0], sizes = [4, 256], strides = [1, 1]} : vector<6x256xf32> to vector<4x256xf32>
    %125 = vector.extract_strided_slice %7 {offsets = [1, 0], sizes = [1, 256], strides = [1, 1]} : vector<6x256xf32> to vector<1x256xf32>
    %126 = vector.broadcast %125 : vector<1x256xf32> to vector<4x256xf32>
    %127 = arith.mulf %124, %126 : vector<4x256xf32>
    %128 = vector.extract_strided_slice %7 {offsets = [2, 0], sizes = [1, 256], strides = [1, 1]} : vector<6x256xf32> to vector<1x256xf32>
    %129 = vector.broadcast %128 : vector<1x256xf32> to vector<4x256xf32>
    %130 = arith.mulf %127, %129 : vector<4x256xf32>
    %131 = vector.extract_strided_slice %1 {offsets = [0, 54], sizes = [6, 4], strides = [1, 1]} : vector<6x90xf32> to vector<6x4xf32>
    %cst_15 = arith.constant dense<0.000000e+00> : vector<6x256xf32>
    %132 = tpu.matmul %131, %130, %cst_15 {dimension_numbers = #tpu.dot_dimension_numbers<[1], [0], [0], [1], [0, 0, 1, 1], [], []>} : vector<6x4xf32>, vector<4x256xf32>, vector<6x256xf32> -> vector<6x256xf32>
    %133 = arith.addf %123, %132 : vector<6x256xf32>
    %134 = vector.extract_strided_slice %7 {offsets = [3, 0], sizes = [3, 256], strides = [1, 1]} : vector<6x256xf32> to vector<3x256xf32>
    %135 = vector.extract_strided_slice %7 {offsets = [1, 0], sizes = [1, 256], strides = [1, 1]} : vector<6x256xf32> to vector<1x256xf32>
    %136 = vector.broadcast %135 : vector<1x256xf32> to vector<3x256xf32>
    %137 = arith.mulf %134, %136 : vector<3x256xf32>
    %138 = vector.extract_strided_slice %7 {offsets = [3, 0], sizes = [1, 256], strides = [1, 1]} : vector<6x256xf32> to vector<1x256xf32>
    %139 = vector.broadcast %138 : vector<1x256xf32> to vector<3x256xf32>
    %140 = arith.mulf %137, %139 : vector<3x256xf32>
    %141 = vector.extract_strided_slice %1 {offsets = [0, 58], sizes = [6, 3], strides = [1, 1]} : vector<6x90xf32> to vector<6x3xf32>
    %cst_16 = arith.constant dense<0.000000e+00> : vector<6x256xf32>
    %142 = tpu.matmul %141, %140, %cst_16 {dimension_numbers = #tpu.dot_dimension_numbers<[1], [0], [0], [1], [0, 0, 1, 1], [], []>} : vector<6x3xf32>, vector<3x256xf32>, vector<6x256xf32> -> vector<6x256xf32>
    %143 = arith.addf %133, %142 : vector<6x256xf32>
    %144 = vector.extract_strided_slice %7 {offsets = [4, 0], sizes = [2, 256], strides = [1, 1]} : vector<6x256xf32> to vector<2x256xf32>
    %145 = vector.extract_strided_slice %7 {offsets = [1, 0], sizes = [1, 256], strides = [1, 1]} : vector<6x256xf32> to vector<1x256xf32>
    %146 = vector.broadcast %145 : vector<1x256xf32> to vector<2x256xf32>
    %147 = arith.mulf %144, %146 : vector<2x256xf32>
    %148 = vector.extract_strided_slice %7 {offsets = [4, 0], sizes = [1, 256], strides = [1, 1]} : vector<6x256xf32> to vector<1x256xf32>
    %149 = vector.broadcast %148 : vector<1x256xf32> to vector<2x256xf32>
    %150 = arith.mulf %147, %149 : vector<2x256xf32>
    %151 = vector.extract_strided_slice %1 {offsets = [0, 61], sizes = [6, 2], strides = [1, 1]} : vector<6x90xf32> to vector<6x2xf32>
    %cst_17 = arith.constant dense<0.000000e+00> : vector<6x256xf32>
    %152 = tpu.matmul %151, %150, %cst_17 {dimension_numbers = #tpu.dot_dimension_numbers<[1], [0], [0], [1], [0, 0, 1, 1], [], []>} : vector<6x2xf32>, vector<2x256xf32>, vector<6x256xf32> -> vector<6x256xf32>
    %153 = arith.addf %143, %152 : vector<6x256xf32>
    %154 = vector.extract_strided_slice %7 {offsets = [5, 0], sizes = [1, 256], strides = [1, 1]} : vector<6x256xf32> to vector<1x256xf32>
    %155 = vector.extract_strided_slice %7 {offsets = [1, 0], sizes = [1, 256], strides = [1, 1]} : vector<6x256xf32> to vector<1x256xf32>
    %156 = arith.mulf %154, %155 : vector<1x256xf32>
    %157 = vector.extract_strided_slice %7 {offsets = [5, 0], sizes = [1, 256], strides = [1, 1]} : vector<6x256xf32> to vector<1x256xf32>
    %158 = arith.mulf %156, %157 : vector<1x256xf32>
    %159 = vector.extract_strided_slice %1 {offsets = [0, 63], sizes = [6, 1], strides = [1, 1]} : vector<6x90xf32> to vector<6x1xf32>
    %160 = vector.broadcast %159 : vector<6x1xf32> to vector<6x256xf32>
    %161 = vector.broadcast %158 : vector<1x256xf32> to vector<6x256xf32>
    %162 = arith.mulf %160, %161 : vector<6x256xf32>
    %163 = arith.addf %153, %162 : vector<6x256xf32>
    %164 = vector.extract_strided_slice %7 {offsets = [2, 0], sizes = [4, 256], strides = [1, 1]} : vector<6x256xf32> to vector<4x256xf32>
    %165 = vector.extract_strided_slice %7 {offsets = [2, 0], sizes = [1, 256], strides = [1, 1]} : vector<6x256xf32> to vector<1x256xf32>
    %166 = vector.broadcast %165 : vector<1x256xf32> to vector<4x256xf32>
    %167 = arith.mulf %164, %166 : vector<4x256xf32>
    %168 = vector.extract_strided_slice %7 {offsets = [2, 0], sizes = [1, 256], strides = [1, 1]} : vector<6x256xf32> to vector<1x256xf32>
    %169 = vector.broadcast %168 : vector<1x256xf32> to vector<4x256xf32>
    %170 = arith.mulf %167, %169 : vector<4x256xf32>
    %171 = vector.extract_strided_slice %1 {offsets = [0, 64], sizes = [6, 4], strides = [1, 1]} : vector<6x90xf32> to vector<6x4xf32>
    %cst_18 = arith.constant dense<0.000000e+00> : vector<6x256xf32>
    %172 = tpu.matmul %171, %170, %cst_18 {dimension_numbers = #tpu.dot_dimension_numbers<[1], [0], [0], [1], [0, 0, 1, 1], [], []>} : vector<6x4xf32>, vector<4x256xf32>, vector<6x256xf32> -> vector<6x256xf32>
    %173 = arith.addf %163, %172 : vector<6x256xf32>
    %174 = vector.extract_strided_slice %7 {offsets = [3, 0], sizes = [3, 256], strides = [1, 1]} : vector<6x256xf32> to vector<3x256xf32>
    %175 = vector.extract_strided_slice %7 {offsets = [2, 0], sizes = [1, 256], strides = [1, 1]} : vector<6x256xf32> to vector<1x256xf32>
    %176 = vector.broadcast %175 : vector<1x256xf32> to vector<3x256xf32>
    %177 = arith.mulf %174, %176 : vector<3x256xf32>
    %178 = vector.extract_strided_slice %7 {offsets = [3, 0], sizes = [1, 256], strides = [1, 1]} : vector<6x256xf32> to vector<1x256xf32>
    %179 = vector.broadcast %178 : vector<1x256xf32> to vector<3x256xf32>
    %180 = arith.mulf %177, %179 : vector<3x256xf32>
    %181 = vector.extract_strided_slice %1 {offsets = [0, 68], sizes = [6, 3], strides = [1, 1]} : vector<6x90xf32> to vector<6x3xf32>
    %cst_19 = arith.constant dense<0.000000e+00> : vector<6x256xf32>
    %182 = tpu.matmul %181, %180, %cst_19 {dimension_numbers = #tpu.dot_dimension_numbers<[1], [0], [0], [1], [0, 0, 1, 1], [], []>} : vector<6x3xf32>, vector<3x256xf32>, vector<6x256xf32> -> vector<6x256xf32>
    %183 = arith.addf %173, %182 : vector<6x256xf32>
    %184 = vector.extract_strided_slice %7 {offsets = [4, 0], sizes = [2, 256], strides = [1, 1]} : vector<6x256xf32> to vector<2x256xf32>
    %185 = vector.extract_strided_slice %7 {offsets = [2, 0], sizes = [1, 256], strides = [1, 1]} : vector<6x256xf32> to vector<1x256xf32>
    %186 = vector.broadcast %185 : vector<1x256xf32> to vector<2x256xf32>
    %187 = arith.mulf %184, %186 : vector<2x256xf32>
    %188 = vector.extract_strided_slice %7 {offsets = [4, 0], sizes = [1, 256], strides = [1, 1]} : vector<6x256xf32> to vector<1x256xf32>
    %189 = vector.broadcast %188 : vector<1x256xf32> to vector<2x256xf32>
    %190 = arith.mulf %187, %189 : vector<2x256xf32>
    %191 = vector.extract_strided_slice %1 {offsets = [0, 71], sizes = [6, 2], strides = [1, 1]} : vector<6x90xf32> to vector<6x2xf32>
    %cst_20 = arith.constant dense<0.000000e+00> : vector<6x256xf32>
    %192 = tpu.matmul %191, %190, %cst_20 {dimension_numbers = #tpu.dot_dimension_numbers<[1], [0], [0], [1], [0, 0, 1, 1], [], []>} : vector<6x2xf32>, vector<2x256xf32>, vector<6x256xf32> -> vector<6x256xf32>
    %193 = arith.addf %183, %192 : vector<6x256xf32>
    %194 = vector.extract_strided_slice %7 {offsets = [5, 0], sizes = [1, 256], strides = [1, 1]} : vector<6x256xf32> to vector<1x256xf32>
    %195 = vector.extract_strided_slice %7 {offsets = [2, 0], sizes = [1, 256], strides = [1, 1]} : vector<6x256xf32> to vector<1x256xf32>
    %196 = arith.mulf %194, %195 : vector<1x256xf32>
    %197 = vector.extract_strided_slice %7 {offsets = [5, 0], sizes = [1, 256], strides = [1, 1]} : vector<6x256xf32> to vector<1x256xf32>
    %198 = arith.mulf %196, %197 : vector<1x256xf32>
    %199 = vector.extract_strided_slice %1 {offsets = [0, 73], sizes = [6, 1], strides = [1, 1]} : vector<6x90xf32> to vector<6x1xf32>
    %200 = vector.broadcast %199 : vector<6x1xf32> to vector<6x256xf32>
    %201 = vector.broadcast %198 : vector<1x256xf32> to vector<6x256xf32>
    %202 = arith.mulf %200, %201 : vector<6x256xf32>
    %203 = arith.addf %193, %202 : vector<6x256xf32>
    %204 = vector.extract_strided_slice %7 {offsets = [3, 0], sizes = [3, 256], strides = [1, 1]} : vector<6x256xf32> to vector<3x256xf32>
    %205 = vector.extract_strided_slice %7 {offsets = [3, 0], sizes = [1, 256], strides = [1, 1]} : vector<6x256xf32> to vector<1x256xf32>
    %206 = vector.broadcast %205 : vector<1x256xf32> to vector<3x256xf32>
    %207 = arith.mulf %204, %206 : vector<3x256xf32>
    %208 = vector.extract_strided_slice %7 {offsets = [3, 0], sizes = [1, 256], strides = [1, 1]} : vector<6x256xf32> to vector<1x256xf32>
    %209 = vector.broadcast %208 : vector<1x256xf32> to vector<3x256xf32>
    %210 = arith.mulf %207, %209 : vector<3x256xf32>
    %211 = vector.extract_strided_slice %1 {offsets = [0, 74], sizes = [6, 3], strides = [1, 1]} : vector<6x90xf32> to vector<6x3xf32>
    %cst_21 = arith.constant dense<0.000000e+00> : vector<6x256xf32>
    %212 = tpu.matmul %211, %210, %cst_21 {dimension_numbers = #tpu.dot_dimension_numbers<[1], [0], [0], [1], [0, 0, 1, 1], [], []>} : vector<6x3xf32>, vector<3x256xf32>, vector<6x256xf32> -> vector<6x256xf32>
    %213 = arith.addf %203, %212 : vector<6x256xf32>
    %214 = vector.extract_strided_slice %7 {offsets = [4, 0], sizes = [2, 256], strides = [1, 1]} : vector<6x256xf32> to vector<2x256xf32>
    %215 = vector.extract_strided_slice %7 {offsets = [3, 0], sizes = [1, 256], strides = [1, 1]} : vector<6x256xf32> to vector<1x256xf32>
    %216 = vector.broadcast %215 : vector<1x256xf32> to vector<2x256xf32>
    %217 = arith.mulf %214, %216 : vector<2x256xf32>
    %218 = vector.extract_strided_slice %7 {offsets = [4, 0], sizes = [1, 256], strides = [1, 1]} : vector<6x256xf32> to vector<1x256xf32>
    %219 = vector.broadcast %218 : vector<1x256xf32> to vector<2x256xf32>
    %220 = arith.mulf %217, %219 : vector<2x256xf32>
    %221 = vector.extract_strided_slice %1 {offsets = [0, 77], sizes = [6, 2], strides = [1, 1]} : vector<6x90xf32> to vector<6x2xf32>
    %cst_22 = arith.constant dense<0.000000e+00> : vector<6x256xf32>
    %222 = tpu.matmul %221, %220, %cst_22 {dimension_numbers = #tpu.dot_dimension_numbers<[1], [0], [0], [1], [0, 0, 1, 1], [], []>} : vector<6x2xf32>, vector<2x256xf32>, vector<6x256xf32> -> vector<6x256xf32>
    %223 = arith.addf %213, %222 : vector<6x256xf32>
    %224 = vector.extract_strided_slice %7 {offsets = [5, 0], sizes = [1, 256], strides = [1, 1]} : vector<6x256xf32> to vector<1x256xf32>
    %225 = vector.extract_strided_slice %7 {offsets = [3, 0], sizes = [1, 256], strides = [1, 1]} : vector<6x256xf32> to vector<1x256xf32>
    %226 = arith.mulf %224, %225 : vector<1x256xf32>
    %227 = vector.extract_strided_slice %7 {offsets = [5, 0], sizes = [1, 256], strides = [1, 1]} : vector<6x256xf32> to vector<1x256xf32>
    %228 = arith.mulf %226, %227 : vector<1x256xf32>
    %229 = vector.extract_strided_slice %1 {offsets = [0, 79], sizes = [6, 1], strides = [1, 1]} : vector<6x90xf32> to vector<6x1xf32>
    %230 = vector.broadcast %229 : vector<6x1xf32> to vector<6x256xf32>
    %231 = vector.broadcast %228 : vector<1x256xf32> to vector<6x256xf32>
    %232 = arith.mulf %230, %231 : vector<6x256xf32>
    %233 = arith.addf %223, %232 : vector<6x256xf32>
    %234 = vector.extract_strided_slice %7 {offsets = [4, 0], sizes = [2, 256], strides = [1, 1]} : vector<6x256xf32> to vector<2x256xf32>
    %235 = vector.extract_strided_slice %7 {offsets = [4, 0], sizes = [1, 256], strides = [1, 1]} : vector<6x256xf32> to vector<1x256xf32>
    %236 = vector.broadcast %235 : vector<1x256xf32> to vector<2x256xf32>
    %237 = arith.mulf %234, %236 : vector<2x256xf32>
    %238 = vector.extract_strided_slice %7 {offsets = [4, 0], sizes = [1, 256], strides = [1, 1]} : vector<6x256xf32> to vector<1x256xf32>
    %239 = vector.broadcast %238 : vector<1x256xf32> to vector<2x256xf32>
    %240 = arith.mulf %237, %239 : vector<2x256xf32>
    %241 = vector.extract_strided_slice %1 {offsets = [0, 80], sizes = [6, 2], strides = [1, 1]} : vector<6x90xf32> to vector<6x2xf32>
    %cst_23 = arith.constant dense<0.000000e+00> : vector<6x256xf32>
    %242 = tpu.matmul %241, %240, %cst_23 {dimension_numbers = #tpu.dot_dimension_numbers<[1], [0], [0], [1], [0, 0, 1, 1], [], []>} : vector<6x2xf32>, vector<2x256xf32>, vector<6x256xf32> -> vector<6x256xf32>
    %243 = arith.addf %233, %242 : vector<6x256xf32>
    %244 = vector.extract_strided_slice %7 {offsets = [5, 0], sizes = [1, 256], strides = [1, 1]} : vector<6x256xf32> to vector<1x256xf32>
    %245 = vector.extract_strided_slice %7 {offsets = [4, 0], sizes = [1, 256], strides = [1, 1]} : vector<6x256xf32> to vector<1x256xf32>
    %246 = arith.mulf %244, %245 : vector<1x256xf32>
    %247 = vector.extract_strided_slice %7 {offsets = [5, 0], sizes = [1, 256], strides = [1, 1]} : vector<6x256xf32> to vector<1x256xf32>
    %248 = arith.mulf %246, %247 : vector<1x256xf32>
    %249 = vector.extract_strided_slice %1 {offsets = [0, 82], sizes = [6, 1], strides = [1, 1]} : vector<6x90xf32> to vector<6x1xf32>
    %250 = vector.broadcast %249 : vector<6x1xf32> to vector<6x256xf32>
    %251 = vector.broadcast %248 : vector<1x256xf32> to vector<6x256xf32>
    %252 = arith.mulf %250, %251 : vector<6x256xf32>
    %253 = arith.addf %243, %252 : vector<6x256xf32>
    %254 = vector.extract_strided_slice %7 {offsets = [5, 0], sizes = [1, 256], strides = [1, 1]} : vector<6x256xf32> to vector<1x256xf32>
    %255 = vector.extract_strided_slice %7 {offsets = [5, 0], sizes = [1, 256], strides = [1, 1]} : vector<6x256xf32> to vector<1x256xf32>
    %256 = arith.mulf %254, %255 : vector<1x256xf32>
    %257 = vector.extract_strided_slice %7 {offsets = [5, 0], sizes = [1, 256], strides = [1, 1]} : vector<6x256xf32> to vector<1x256xf32>
    %258 = arith.mulf %256, %257 : vector<1x256xf32>
    %259 = vector.extract_strided_slice %1 {offsets = [0, 83], sizes = [6, 1], strides = [1, 1]} : vector<6x90xf32> to vector<6x1xf32>
    %260 = vector.broadcast %259 : vector<6x1xf32> to vector<6x256xf32>
    %261 = vector.broadcast %258 : vector<1x256xf32> to vector<6x256xf32>
    %262 = arith.mulf %260, %261 : vector<6x256xf32>
    %263 = arith.addf %253, %262 : vector<6x256xf32>
    %264 = vector.extract_strided_slice %1 {offsets = [0, 84], sizes = [6, 6], strides = [1, 1]} : vector<6x90xf32> to vector<6x6xf32>
    %265 = math.sin %7 : vector<6x256xf32>
    %cst_24 = arith.constant dense<0.000000e+00> : vector<6x256xf32>
    %266 = tpu.matmul %264, %265, %cst_24 {dimension_numbers = #tpu.dot_dimension_numbers<[1], [0], [0], [1], [0, 0, 1, 1], [], []>} : vector<6x6xf32>, vector<6x256xf32>, vector<6x256xf32> -> vector<6x256xf32>
    %267 = arith.addf %263, %266 : vector<6x256xf32>
    %268 = arith.addf %7, %267 : vector<6x256xf32>
    %c0_25 = arith.constant 0 : index
    %c0_26 = arith.constant 0 : index
    %269 = vector.load %arg3[%c0_25, %c0_26] : memref<6x256xf32, #tpu.memory_space<vmem>>, vector<6x256xf32>
    tpu.vector_store %arg3[%c0_25, %c0_26], %268 {strides = array<i32>} : memref<6x256xf32, #tpu.memory_space<vmem>>, vector<6x256xf32>,
    return
  }
  func.func @transform_0(%arg0: i32) -> (i32, i32) {
    %c0_i32 = arith.constant 0 : i32
    %c0_i32_0 = arith.constant 0 : i32
    return %arg0, %c0_i32 : i32, i32
  }
  func.func @transform_1(%arg0: i32) -> (i32, i32) {
    %c0_i32 = arith.constant 0 : i32
    %c0_i32_0 = arith.constant 0 : i32
    %c0_i32_1 = arith.constant 0 : i32
    return %c0_i32, %c0_i32_0 : i32, i32
  }
  func.func @transform_2(%arg0: i32) -> (i32, i32) {
    %c0_i32 = arith.constant 0 : i32
    %c0_i32_0 = arith.constant 0 : i32
    return %c0_i32, %arg0 : i32, i32
  }
}

</mosaic_0001>

<llo_original>
// kernel: tpu_custom_call.1
$region0: #{tpu_custom_call.1}
  #allocation0 [shape = 'u32[]', space=smem, size = 0x4, offset = 0x4, fixed_abs, tag = 'smem constant byte address 0x4 - core index']
  #allocation1 [shape = 'u32[72,128]{1,0:T(1,128)}', space=vmem, size = 0x9000, scoped, tag = 'internal scratch']
  %s0 = inlined_call_operand.vmem [shape: f32[1000,6], index: 0, kind: input, shape index: {}]
  %s1 = inlined_call_operand.vmem [shape: f32[6,90], index: 1, kind: input, shape index: {}]
  %s2 = inlined_call_operand.hbm [shape: f32[6,1000], index: 2, kind: output, shape index: {}]
  %s3 = sld [smem:[#allocation0]]
  $region41: #{tpu_custom_call.1} parent=0
    _
  %s5 = ssub.s32 1, %s3
  %s6 = scalar_select 0, %s5, %s3
  $region1: #{tpu_custom_call.1} parent=0
    #allocation2 [shape = 'u8[16384]{0}', space=vmem, size = 0x4000, scoped, tag = 'output window, operand 0']
    #allocation3 [shape = 's32[2]{0}', space=sflag, size = 0x8, scoped, tag = 'scoped memory for tpu_custom_call.1']
    %7 = vsyncpa [#allocation3], 0
    %s8 = scalar_lea.sflag [#allocation3], 1
    %9 = vsyncpa %s8, 0
    loop: start=0, step=1, limit=6
    $region2: #{tpu_custom_call.1} parent=1 // loop_pre_header
      _
    $region3: #{tpu_custom_call.1} parent=1 // loop_header
      %s11 = sphi 0, %s15
      %p12 = scmp.ge.s32.totalorder %s11, 6
      %s21 = sphi 0, %s23
      %s24 = sphi 0, %s21
      %s25 = sphi 0, %s24
      %s41 = sphi 0, %s25
      %s45 = sphi 0, %s45
      %s47 = sphi 0, %s45
      %s48 = sphi 0, %s47
      %s62 = sphi 0, %s48
      %s68 = sphi 0, %s70
      %s71 = sphi 0, %s68
      %s72 = sphi 0, %s71
      %s88 = sphi 0, %s72
    $region4: #{tpu_custom_call.1} parent=1 // loop_header_branch
      %14 = sbr.rel (%p12) target = $region8
    $region5: #{tpu_custom_call.1} parent=1 // loop_body
      %s16 = ssub.s32 %s11, 1
      %s17 = ssub.s32 %s11, 2
      %s18 = sadd.s32 %s11, 1
      %s19 = ssub.s32 %s11, %s18
      %p20 = scmp.eq.s32.totalorder %s19, 0
      %s22 = sadd.s32 %s21, 1
      %s23 = scalar_select %p20, %s21, %s22
      %p26 = pneg %p20
      %p27 = scmp.eq.s32.totalorder %s11, 3
      %p28 = por %p26, %p27
      %p29 = scmp.ne.s32.totalorder %s21, %s24
      %p30 = scmp.eq.s32.totalorder %s11, 0
      %p31 = por %p29, %p30
      %p32 = scmp.ne.s32.totalorder %s21, %s24
      %p33 = scmp.eq.s32.totalorder %s16, 3
      %p34 = por %p32, %p33
      %p35 = scmp.ne.s32.totalorder %s24, %s25
      %p36 = scmp.eq.s32.totalorder %s16, 0
      %p37 = por %p35, %p36
      %p38 = scmp.ne.s32.totalorder %s24, %s25
      %p39 = scmp.eq.s32.totalorder %s17, 3
      %p40 = por %p38, %p39
      %p42 = scmp.ne.s32.totalorder %s25, %s41
      %p43 = scmp.eq.s32.totalorder %s17, 0
      %p44 = por %p42, %p43
      %s46 = sadd.s32 %s45, 1
      %p49 = scmp.eq.s32.totalorder %s11, 3
      %p50 = scmp.ne.s32.totalorder %s45, %s47
      %p51 = scmp.eq.s32.totalorder %s11, 0
      %p52 = por %p50, %p51
      %p53 = scmp.ne.s32.totalorder %s45, %s47
      %p54 = scmp.eq.s32.totalorder %s16, 3
      %p55 = por %p53, %p54
      %p56 = scmp.ne.s32.totalorder %s47, %s48
      %p57 = scmp.eq.s32.totalorder %s16, 0
      %p58 = por %p56, %p57
      %p59 = scmp.ne.s32.totalorder %s47, %s48
      %p60 = scmp.eq.s32.totalorder %s17, 3
      %p61 = por %p59, %p60
      %p63 = scmp.ne.s32.totalorder %s48, %s62
      %p64 = scmp.eq.s32.totalorder %s17, 0
      %p65 = por %p63, %p64
      %s66 = ssub.s32 %s11, %s18
      %p67 = scmp.eq.s32.totalorder %s66, 0
      %s69 = sadd.s32 %s68, 1
      %s70 = scalar_select %p67, %s68, %s69
      %p73 = pneg %p67
      %p74 = scmp.eq.s32.totalorder %s11, 3
      %p75 = por %p73, %p74
      %p76 = scmp.ne.s32.totalorder %s68, %s71
      %p77 = scmp.eq.s32.totalorder %s11, 0
      %p78 = por %p76, %p77
      %p79 = scmp.ne.s32.totalorder %s68, %s71
      %p80 = scmp.eq.s32.totalorder %s16, 3
      %p81 = por %p79, %p80
      %p82 = scmp.ne.s32.totalorder %s71, %s72
      %p83 = scmp.eq.s32.totalorder %s16, 0
      %p84 = por %p82, %p83
      %p85 = scmp.ne.s32.totalorder %s71, %s72
      %p86 = scmp.eq.s32.totalorder %s17, 3
      %p87 = por %p85, %p86
      %p89 = scmp.ne.s32.totalorder %s72, %s88
      %p90 = scmp.eq.s32.totalorder %s17, 0
      %p91 = por %p89, %p90
      %p92 = scmp.le.s32.totalorder 1, %s11
      %p93 = scmp.lt.s32.totalorder %s11, 5
      %p94 = pnand %p92, %p93
      %p95 = pneg %p94
      // Predicated region
      $region9: #{tpu_custom_call.1} parent=5 // pred_check
        _
      $region10: #{tpu_custom_call.1} parent=5 // pred_check_branch
        %97 = sbr.rel (%p94) target = $region12
      $region11: #{tpu_custom_call.1} parent=5 // pred_region
        %s98 = ssub.s32 %s11, 1
        // Predicated region
        $region13: #{tpu_custom_call.1} parent=11 // pred_check
          %p99 = pneg %p58
        $region14: #{tpu_custom_call.1} parent=11 // pred_check_branch
          %101 = sbr.rel (%p99) target = $region16
        $region15: #{tpu_custom_call.1} parent=11 // pred_region
          _
        $region16: #{tpu_custom_call.1} parent=11 // pred_fallthru
          _
      $region12: #{tpu_custom_call.1} parent=5 // pred_fallthru
        _
      %p102 = scmp.lt.s32.totalorder %s11, 4
      // Predicated region
      $region17: #{tpu_custom_call.1} parent=5 // pred_check
        %p103 = pneg %p102
      $region18: #{tpu_custom_call.1} parent=5 // pred_check_branch
        %105 = sbr.rel (%p103) target = $region20
      $region19: #{tpu_custom_call.1} parent=5 // pred_region
        // Predicated region
        $region21: #{tpu_custom_call.1} parent=19 // pred_check
          %p106 = pneg %p31
        $region22: #{tpu_custom_call.1} parent=19 // pred_check_branch
          %108 = sbr.rel (%p106) target = $region24
        $region23: #{tpu_custom_call.1} parent=19 // pred_region
          %s109 = smul.u32 32, %s11
          %s110 = ssub.s32 125, %s109
          %p111 = scmp.lt.s32.totalorder %s110, 32
          %s112 = scalar_select %p111, %s110, 32
          %s113 = smul.u32 8, %s112
          %p114 = scmp.lt.s32.totalorder %s109, 124
          %s115 = scalar_select %p114, %s109, 124
          %s116 = smul.addr %s115, 8
          %s117 = scalar_lea.vmem %s0, %s116
          %s118 = smul.u32 32, %s11
          %s119 = ssub.s32 125, %s118
          %p120 = scmp.lt.s32.totalorder %s119, 32
          %s121 = scalar_select %p120, %s119, 32
          %s122 = smul.u32 8, %s121
        $region24: #{tpu_custom_call.1} parent=19 // pred_fallthru
          _
      $region20: #{tpu_custom_call.1} parent=5 // pred_fallthru
        _
      %p123 = scmp.le.s32.totalorder 1, %s11
      %p124 = scmp.lt.s32.totalorder %s11, 5
      %p125 = pnand %p123, %p124
      %p126 = pneg %p125
      // Predicated region
      $region25: #{tpu_custom_call.1} parent=5 // pred_check
        _
      $region26: #{tpu_custom_call.1} parent=5 // pred_check_branch
        %128 = sbr.rel (%p125) target = $region28
      $region27: #{tpu_custom_call.1} parent=5 // pred_region
        %s129 = ssub.s32 %s11, 1
        %s130 = smul.u32 32, %s16
        %s131 = ssub.s32 125, %s130
        %p132 = scmp.lt.s32.totalorder %s131, 32
        %s133 = scalar_select %p132, %s131, 32
        %s134 = smul.u32 8, %s133
        %p135 = scmp.lt.s32.totalorder %s130, 124
        %s136 = scalar_select %p135, %s130, 124
        %s137 = smul.addr %s136, 8
        %s138 = scalar_lea.vmem %s0, %s137
        %p139 = pneg %p37
        %p140 = pneg %p34
        %p141 = pneg %p58
        %p142 = pneg %p55
        %p143 = pneg %p84
        %p144 = pneg %p81
        %s145 = sand.u32 %s71, 1
        %s146 = scalar_lea.sflag [#allocation3], %s145
        %s147 = sand.u32 %s71, 1
        %s148 = smul.addr %s147, 16
        %s149 = scalar_lea.vmem [#allocation2], %s148
        %s150 = smul.u32 32, %s16
        %s151 = ssub.s32 125, %s150
        %p152 = scmp.lt.s32.totalorder %s151, 32
        %s153 = scalar_select %p152, %s151, 32
        %s154 = smul.u32 8, %s153
        %p155 = scmp.lt.s32.totalorder %s150, 124
        %s156 = scalar_select %p155, %s150, 124
        %s157 = smul.addr %s156, 8
        %s158 = scalar_lea.vmem %s0, %s157
        %s159 = smul.u32 32, %s16
        %s160 = ssub.s32 125, %s159
        %p161 = scmp.lt.s32.totalorder %s160, 32
        %s162 = scalar_select %p161, %s160, 32
        %s163 = smul.u32 8, %s162
        %s164 = smul.u32 2, %s16
        %v165 = vld [vmem:[%s158] sm:$0xff]
        %v166 = vld [vmem:[%s158 + $0x8] sm:$0xff]
        %v167 = vld [vmem:[%s158 + $0x10] sm:$0xff]
        %v168 = vld [vmem:[%s158 + $0x18] sm:$0xff]
        %v169 = vld [vmem:[%s158 + $0x20] sm:$0xff]
        %v170 = vld [vmem:[%s158 + $0x28] sm:$0xff]
        %v171 = vld [vmem:[%s158 + $0x30] sm:$0xff]
        %v172 = vld [vmem:[%s158 + $0x38] sm:$0xff]
        %v173 = vld [vmem:[%s158 + $0x40] sm:$0xff]
        %v174 = vld [vmem:[%s158 + $0x48] sm:$0xff]
        %v175 = vld [vmem:[%s158 + $0x50] sm:$0xff]
        %v176 = vld [vmem:[%s158 + $0x58] sm:$0xff]
        %v177 = vld [vmem:[%s158 + $0x60] sm:$0xff]
        %v178 = vld [vmem:[%s158 + $0x68] sm:$0xff]
        %v179 = vld [vmem:[%s158 + $0x70] sm:$0xff]
        %v180 = vld [vmem:[%s158 + $0x78] sm:$0xff]
        %v181 = vld [vmem:[%s158 + $0x80] sm:$0xff]
        %v182 = vld [vmem:[%s158 + $0x88] sm:$0xff]
        %v183 = vld [vmem:[%s158 + $0x90] sm:$0xff]
        %v184 = vld [vmem:[%s158 + $0x98] sm:$0xff]
        %v185 = vld [vmem:[%s158 + $0xa0] sm:$0xff]
        %v186 = vld [vmem:[%s158 + $0xa8] sm:$0xff]
        %v187 = vld [vmem:[%s158 + $0xb0] sm:$0xff]
        %v188 = vld [vmem:[%s158 + $0xb8] sm:$0xff]
        %v189 = vld [vmem:[%s158 + $0xc0] sm:$0xff]
        %v190 = vld [vmem:[%s158 + $0xc8] sm:$0xff]
        %v191 = vld [vmem:[%s158 + $0xd0] sm:$0xff]
        %v192 = vld [vmem:[%s158 + $0xd8] sm:$0xff]
        %v193 = vld [vmem:[%s158 + $0xe0] sm:$0xff]
        %v194 = vld [vmem:[%s158 + $0xe8] sm:$0xff]
        %v195 = vld [vmem:[%s158 + $0xf0] sm:$0xff]
        %v196 = vld [vmem:[%s158 + $0xf8] sm:$0xff]
        %v197 = vld [vmem:[%s1] sm:$0x3f]
        %v198 = vlaneseq
        %v199 = vshrl.u32 %v198, 7
        %v200 = vlaneseq
        %v201 = vand.u32 %v200, 127
        %vm202 = vcmp.eq.s32.totalorder %v199, %v201
        %v203 = vsel %vm202, 1, 0
        %v204 = vcvt.s32.f32 %v203
        %vm205 = vcmask 48128
        %v207 = vsel %vm205, %v204, 0
        %v210 = vsel %vm205, %v165, 0
        %v213 = vsel %vm205, %v166, 0
        %v216 = vsel %vm205, %v167, 0
        %v219 = vsel %vm205, %v168, 0
        %v222 = vsel %vm205, %v169, 0
        %v225 = vsel %vm205, %v170, 0
        %v228 = vsel %vm205, %v171, 0
        %v231 = vsel %vm205, %v172, 0
        %v234 = vsel %vm205, %v173, 0
        %v237 = vsel %vm205, %v174, 0
        %v240 = vsel %vm205, %v175, 0
        %v243 = vsel %vm205, %v176, 0
        %v246 = vsel %vm205, %v177, 0
        %v249 = vsel %vm205, %v178, 0
        %v252 = vsel %vm205, %v179, 0
        %v255 = vsel %vm205, %v180, 0
        %v258 = vsel %vm205, %v181, 0
        %v261 = vsel %vm205, %v182, 0
        %v264 = vsel %vm205, %v183, 0
        %v267 = vsel %vm205, %v184, 0
        %v270 = vsel %vm205, %v185, 0
        %v273 = vsel %vm205, %v186, 0
        %v276 = vsel %vm205, %v187, 0
        %v279 = vsel %vm205, %v188, 0
        %v282 = vsel %vm205, %v189, 0
        %v285 = vsel %vm205, %v190, 0
        %v288 = vsel %vm205, %v191, 0
        %v291 = vsel %vm205, %v192, 0
        %v294 = vsel %vm205, %v193, 0
        %v297 = vsel %vm205, %v194, 0
        %v300 = vsel %vm205, %v195, 0
        %v303 = vsel %vm205, %v196, 0
        %305 = vmatpush.xpose.msra.mxu0 %v255
        %306 = vmatpush.xpose.msra.mxu0 %v252
        %307 = vmatpush.xpose.msra.mxu0 %v249
        %308 = vmatpush.xpose.msra.mxu0 %v246
        %309 = vmatpush.xpose.msra.mxu0 %v243
        %310 = vmatpush.xpose.msra.mxu0 %v240
        %311 = vmatpush.xpose.msra.mxu0 %v237
        %312 = vmatpush.xpose.msra.mxu0 %v234
        %313 = vmatpush.xpose.msra.mxu0 %v231
        %314 = vmatpush.xpose.msra.mxu0 %v228
        %315 = vmatpush.xpose.msra.mxu0 %v225
        %316 = vmatpush.xpose.msra.mxu0 %v222
        %317 = vmatpush.xpose.msra.mxu0 %v219
        %318 = vmatpush.xpose.msra.mxu0 %v216
        %319 = vmatpush.xpose.msra.mxu0 %v213
        %320 = vmatpush.xpose.msra.mxu0 %v210
        %321 = vmatmul.f32.gmra.mxu0 %v207
        %v322 = vpop.f32.mrf.mxu0
        %v323 = vadd.f32 0.0, %v322
        %324 = vdwg.mxu0
        %325 = vmatpush.xpose.msra.mxu0 %v303
        %326 = vmatpush.xpose.msra.mxu0 %v300
        %327 = vmatpush.xpose.msra.mxu0 %v297
        %328 = vmatpush.xpose.msra.mxu0 %v294
        %329 = vmatpush.xpose.msra.mxu0 %v291
        %330 = vmatpush.xpose.msra.mxu0 %v288
        %331 = vmatpush.xpose.msra.mxu0 %v285
        %332 = vmatpush.xpose.msra.mxu0 %v282
        %333 = vmatpush.xpose.msra.mxu0 %v279
        %334 = vmatpush.xpose.msra.mxu0 %v276
        %335 = vmatpush.xpose.msra.mxu0 %v273
        %336 = vmatpush.xpose.msra.mxu0 %v270
        %337 = vmatpush.xpose.msra.mxu0 %v267
        %338 = vmatpush.xpose.msra.mxu0 %v264
        %339 = vmatpush.xpose.msra.mxu0 %v261
        %340 = vmatpush.xpose.msra.mxu0 %v258
        %341 = vmatmul.f32.gmra.mxu0 %v207
        %v342 = vpop.f32.mrf.mxu0
        %v343 = vadd.f32 0.0, %v342
        %344 = vdwg.mxu0
        %346 = vset.pattern.permute.xlu0 0
        %347 = vperm.xlu0 %346, %v197
        %v348 = vpop.permute.xlu0 %347
        %350 = vrot.lane.b32.xlu0 %v197, 127
        %v351 = vpop.permute.xlu0 %350
        %v352 = vsel %vm205, %v351, 0
        %354 = vmatpush.xpose.msra.mxu0 %v255
        %355 = vmatpush.xpose.msra.mxu0 %v252
        %356 = vmatpush.xpose.msra.mxu0 %v249
        %357 = vmatpush.xpose.msra.mxu0 %v246
        %358 = vmatpush.xpose.msra.mxu0 %v243
        %359 = vmatpush.xpose.msra.mxu0 %v240
        %360 = vmatpush.xpose.msra.mxu0 %v237
        %361 = vmatpush.xpose.msra.mxu0 %v234
        %362 = vmatpush.xpose.msra.mxu0 %v231
        %363 = vmatpush.xpose.msra.mxu0 %v228
        %364 = vmatpush.xpose.msra.mxu0 %v225
        %365 = vmatpush.xpose.msra.mxu0 %v222
        %366 = vmatpush.xpose.msra.mxu0 %v219
        %367 = vmatpush.xpose.msra.mxu0 %v216
        %368 = vmatpush.xpose.msra.mxu0 %v213
        %369 = vmatpush.xpose.msra.mxu0 %v210
        %370 = vmatmul.f32.gmra.mxu0 %v352
        %v371 = vpop.f32.mrf.mxu0
        %v372 = vadd.f32 %v348, %v371
        %373 = vdwg.mxu0
        %374 = vmatpush.xpose.msra.mxu0 %v303
        %375 = vmatpush.xpose.msra.mxu0 %v300
        %376 = vmatpush.xpose.msra.mxu0 %v297
        %377 = vmatpush.xpose.msra.mxu0 %v294
        %378 = vmatpush.xpose.msra.mxu0 %v291
        %379 = vmatpush.xpose.msra.mxu0 %v288
        %380 = vmatpush.xpose.msra.mxu0 %v285
        %381 = vmatpush.xpose.msra.mxu0 %v282
        %382 = vmatpush.xpose.msra.mxu0 %v279
        %383 = vmatpush.xpose.msra.mxu0 %v276
        %384 = vmatpush.xpose.msra.mxu0 %v273
        %385 = vmatpush.xpose.msra.mxu0 %v270
        %386 = vmatpush.xpose.msra.mxu0 %v267
        %387 = vmatpush.xpose.msra.mxu0 %v264
        %388 = vmatpush.xpose.msra.mxu0 %v261
        %389 = vmatpush.xpose.msra.mxu0 %v258
        %390 = vmatmul.f32.gmra.mxu0 %v352
        %v391 = vpop.f32.mrf.mxu0
        %v392 = vadd.f32 %v348, %v391
        %393 = vdwg.mxu0
        %v394 = vperm.slane %v323, 0
        %v395 = vperm.slane %v343, 0
        %v396 = vmul.f32 %v323, %v394
        %v397 = vmul.f32 %v343, %v395
        %398 = vrot.lane.b32.xlu0 %v197, 121
        %v399 = vpop.permute.xlu0 %398
        %v400 = vsel %vm205, %v399, 0
        %vm402 = vcmask 1045504
        %v404 = vsel %vm402, %v396, 0
        %v407 = vsel %vm402, %v397, 0
        %409 = vmatpush.msra.mxu0 0.0
        %410 = vmatpush.msra.mxu0 0.0
        %411 = vmatpush.msra.mxu0 0.0
        %412 = vmatpush.msra.mxu0 0.0
        %413 = vmatpush.msra.mxu0 0.0
        %414 = vmatpush.msra.mxu0 0.0
        %415 = vmatpush.msra.mxu0 0.0
        %416 = vmatpush.msra.mxu0 0.0
        %417 = vmatpush.msra.mxu0 0.0
        %418 = vmatpush.msra.mxu0 0.0
        %419 = vmatpush.msra.mxu0 0.0
        %420 = vmatpush.msra.mxu0 0.0
        %421 = vmatpush.msra.mxu0 0.0
        %422 = vmatpush.msra.mxu0 0.0
        %423 = vmatpush.msra.mxu0 0.0
        %424 = vmatpush.msra.mxu0 %v404
        %425 = vmatmul.f32.gmra.mxu0 %v400
        %v426 = vpop.f32.mrf.mxu0
        %v427 = vadd.f32 0.0, %v426
        %428 = vdwg.mxu0
        %429 = vmatpush.msra.mxu0 0.0
        %430 = vmatpush.msra.mxu0 0.0
        %431 = vmatpush.msra.mxu0 0.0
        %432 = vmatpush.msra.mxu0 0.0
        %433 = vmatpush.msra.mxu0 0.0
        %434 = vmatpush.msra.mxu0 0.0
        %435 = vmatpush.msra.mxu0 0.0
        %436 = vmatpush.msra.mxu0 0.0
        %437 = vmatpush.msra.mxu0 0.0
        %438 = vmatpush.msra.mxu0 0.0
        %439 = vmatpush.msra.mxu0 0.0
        %440 = vmatpush.msra.mxu0 0.0
        %441 = vmatpush.msra.mxu0 0.0
        %442 = vmatpush.msra.mxu0 0.0
        %443 = vmatpush.msra.mxu0 0.0
        %444 = vmatpush.msra.mxu0 %v407
        %445 = vmatmul.f32.gmra.mxu0 %v400
        %v446 = vpop.f32.mrf.mxu0
        %v447 = vadd.f32 0.0, %v446
        %448 = vdwg.mxu0
        %v449 = vadd.f32 %v372, %v427
        %v450 = vadd.f32 %v392, %v447
        %v451 = vperm.slane %v323, 1
        %v452 = vperm.slane %v343, 1
        %v453 = vmul.f32 %v323, %v451
        %v454 = vmul.f32 %v343, %v452
        %455 = vrot.lane.b32.xlu0 %v197, 115
        %v456 = vpop.permute.xlu0 %455
        %v459 = vrot.slane %v453, 1
        %v460 = vrot.slane %v454, 1
        %vm461 = vcmask 39936
        %v462 = vsel %vm461, %v456, 0
        %vm464 = vcmask 1044480
        %v465 = vsel %vm464, %v459, 0
        %v467 = vsel %vm464, %v460, 0
        %469 = vmatpush.msra.mxu0 0.0
        %470 = vmatpush.msra.mxu0 0.0
        %471 = vmatpush.msra.mxu0 0.0
        %472 = vmatpush.msra.mxu0 0.0
        %473 = vmatpush.msra.mxu0 0.0
        %474 = vmatpush.msra.mxu0 0.0
        %475 = vmatpush.msra.mxu0 0.0
        %476 = vmatpush.msra.mxu0 0.0
        %477 = vmatpush.msra.mxu0 0.0
        %478 = vmatpush.msra.mxu0 0.0
        %479 = vmatpush.msra.mxu0 0.0
        %480 = vmatpush.msra.mxu0 0.0
        %481 = vmatpush.msra.mxu0 0.0
        %482 = vmatpush.msra.mxu0 0.0
        %483 = vmatpush.msra.mxu0 0.0
        %484 = vmatpush.msra.mxu0 %v465
        %485 = vmatmul.f32.gmra.mxu0 %v462
        %v486 = vpop.f32.mrf.mxu0
        %v487 = vadd.f32 0.0, %v486
        %488 = vdwg.mxu0
        %489 = vmatpush.msra.mxu0 0.0
        %490 = vmatpush.msra.mxu0 0.0
        %491 = vmatpush.msra.mxu0 0.0
        %492 = vmatpush.msra.mxu0 0.0
        %493 = vmatpush.msra.mxu0 0.0
        %494 = vmatpush.msra.mxu0 0.0
        %495 = vmatpush.msra.mxu0 0.0
        %496 = vmatpush.msra.mxu0 0.0
        %497 = vmatpush.msra.mxu0 0.0
        %498 = vmatpush.msra.mxu0 0.0
        %499 = vmatpush.msra.mxu0 0.0
        %500 = vmatpush.msra.mxu0 0.0
        %501 = vmatpush.msra.mxu0 0.0
        %502 = vmatpush.msra.mxu0 0.0
        %503 = vmatpush.msra.mxu0 0.0
        %504 = vmatpush.msra.mxu0 %v467
        %505 = vmatmul.f32.gmra.mxu0 %v462
        %v506 = vpop.f32.mrf.mxu0
        %v507 = vadd.f32 0.0, %v506
        %508 = vdwg.mxu0
        %v509 = vadd.f32 %v449, %v487
        %v510 = vadd.f32 %v450, %v507
        %v511 = vperm.slane %v323, 2
        %v512 = vperm.slane %v343, 2
        %v513 = vmul.f32 %v323, %v511
        %v514 = vmul.f32 %v343, %v512
        %515 = vrot.lane.b32.xlu0 %v197, 110
        %v516 = vpop.permute.xlu0 %515
        %v519 = vrot.slane %v513, 2
        %v520 = vrot.slane %v514, 2
        %vm521 = vcmask 31744
        %v522 = vsel %vm521, %v516, 0
        %vm524 = vcmask 1043456
        %v525 = vsel %vm524, %v519, 0
        %v527 = vsel %vm524, %v520, 0
        %529 = vmatpush.msra.mxu0 0.0
        %530 = vmatpush.msra.mxu0 0.0
        %531 = vmatpush.msra.mxu0 0.0
        %532 = vmatpush.msra.mxu0 0.0
        %533 = vmatpush.msra.mxu0 0.0
        %534 = vmatpush.msra.mxu0 0.0
        %535 = vmatpush.msra.mxu0 0.0
        %536 = vmatpush.msra.mxu0 0.0
        %537 = vmatpush.msra.mxu0 0.0
        %538 = vmatpush.msra.mxu0 0.0
        %539 = vmatpush.msra.mxu0 0.0
        %540 = vmatpush.msra.mxu0 0.0
        %541 = vmatpush.msra.mxu0 0.0
        %542 = vmatpush.msra.mxu0 0.0
        %543 = vmatpush.msra.mxu0 0.0
        %544 = vmatpush.msra.mxu0 %v525
        %545 = vmatmul.f32.gmra.mxu0 %v522
        %v546 = vpop.f32.mrf.mxu0
        %v547 = vadd.f32 0.0, %v546
        %548 = vdwg.mxu0
        %549 = vmatpush.msra.mxu0 0.0
        %550 = vmatpush.msra.mxu0 0.0
        %551 = vmatpush.msra.mxu0 0.0
        %552 = vmatpush.msra.mxu0 0.0
        %553 = vmatpush.msra.mxu0 0.0
        %554 = vmatpush.msra.mxu0 0.0
        %555 = vmatpush.msra.mxu0 0.0
        %556 = vmatpush.msra.mxu0 0.0
        %557 = vmatpush.msra.mxu0 0.0
        %558 = vmatpush.msra.mxu0 0.0
        %559 = vmatpush.msra.mxu0 0.0
        %560 = vmatpush.msra.mxu0 0.0
        %561 = vmatpush.msra.mxu0 0.0
        %562 = vmatpush.msra.mxu0 0.0
        %563 = vmatpush.msra.mxu0 0.0
        %564 = vmatpush.msra.mxu0 %v527
        %565 = vmatmul.f32.gmra.mxu0 %v522
        %v566 = vpop.f32.mrf.mxu0
        %v567 = vadd.f32 0.0, %v566
        %568 = vdwg.mxu0
        %v569 = vadd.f32 %v509, %v547
        %v570 = vadd.f32 %v510, %v567
        %v571 = vperm.slane %v323, 3
        %v572 = vperm.slane %v343, 3
        %v573 = vmul.f32 %v323, %v571
        %v574 = vmul.f32 %v343, %v572
        %575 = vrot.lane.b32.xlu0 %v197, 106
        %v576 = vpop.permute.xlu0 %575
        %v579 = vrot.slane %v573, 3
        %v580 = vrot.slane %v574, 3
        %vm581 = vcmask 23552
        %v582 = vsel %vm581, %v576, 0
        %vm584 = vcmask 1042432
        %v585 = vsel %vm584, %v579, 0
        %v587 = vsel %vm584, %v580, 0
        %589 = vmatpush.msra.mxu0 0.0
        %590 = vmatpush.msra.mxu0 0.0
        %591 = vmatpush.msra.mxu0 0.0
        %592 = vmatpush.msra.mxu0 0.0
        %593 = vmatpush.msra.mxu0 0.0
        %594 = vmatpush.msra.mxu0 0.0
        %595 = vmatpush.msra.mxu0 0.0
        %596 = vmatpush.msra.mxu0 0.0
        %597 = vmatpush.msra.mxu0 0.0
        %598 = vmatpush.msra.mxu0 0.0
        %599 = vmatpush.msra.mxu0 0.0
        %600 = vmatpush.msra.mxu0 0.0
        %601 = vmatpush.msra.mxu0 0.0
        %602 = vmatpush.msra.mxu0 0.0
        %603 = vmatpush.msra.mxu0 0.0
        %604 = vmatpush.msra.mxu0 %v585
        %605 = vmatmul.f32.gmra.mxu0 %v582
        %v606 = vpop.f32.mrf.mxu0
        %v607 = vadd.f32 0.0, %v606
        %608 = vdwg.mxu0
        %609 = vmatpush.msra.mxu0 0.0
        %610 = vmatpush.msra.mxu0 0.0
        %611 = vmatpush.msra.mxu0 0.0
        %612 = vmatpush.msra.mxu0 0.0
        %613 = vmatpush.msra.mxu0 0.0
        %614 = vmatpush.msra.mxu0 0.0
        %615 = vmatpush.msra.mxu0 0.0
        %616 = vmatpush.msra.mxu0 0.0
        %617 = vmatpush.msra.mxu0 0.0
        %618 = vmatpush.msra.mxu0 0.0
        %619 = vmatpush.msra.mxu0 0.0
        %620 = vmatpush.msra.mxu0 0.0
        %621 = vmatpush.msra.mxu0 0.0
        %622 = vmatpush.msra.mxu0 0.0
        %623 = vmatpush.msra.mxu0 0.0
        %624 = vmatpush.msra.mxu0 %v587
        %625 = vmatmul.f32.gmra.mxu0 %v582
        %v626 = vpop.f32.mrf.mxu0
        %v627 = vadd.f32 0.0, %v626
        %628 = vdwg.mxu0
        %v629 = vadd.f32 %v569, %v607
        %v630 = vadd.f32 %v570, %v627
        %v631 = vperm.slane %v323, 4
        %v632 = vperm.slane %v343, 4
        %v633 = vmul.f32 %v323, %v631
        %v634 = vmul.f32 %v343, %v632
        %635 = vrot.lane.b32.xlu0 %v197, 103
        %v636 = vpop.permute.xlu0 %635
        %v639 = vrot.slane %v633, 4
        %v640 = vrot.slane %v634, 4
        %vm641 = vcmask 15360
        %v642 = vsel %vm641, %v636, 0
        %vm644 = vcmask 1041408
        %v645 = vsel %vm644, %v639, 0
        %v647 = vsel %vm644, %v640, 0
        %649 = vmatpush.msra.mxu0 0.0
        %650 = vmatpush.msra.mxu0 0.0
        %651 = vmatpush.msra.mxu0 0.0
        %652 = vmatpush.msra.mxu0 0.0
        %653 = vmatpush.msra.mxu0 0.0
        %654 = vmatpush.msra.mxu0 0.0
        %655 = vmatpush.msra.mxu0 0.0
        %656 = vmatpush.msra.mxu0 0.0
        %657 = vmatpush.msra.mxu0 0.0
        %658 = vmatpush.msra.mxu0 0.0
        %659 = vmatpush.msra.mxu0 0.0
        %660 = vmatpush.msra.mxu0 0.0
        %661 = vmatpush.msra.mxu0 0.0
        %662 = vmatpush.msra.mxu0 0.0
        %663 = vmatpush.msra.mxu0 0.0
        %664 = vmatpush.msra.mxu0 %v645
        %665 = vmatmul.f32.gmra.mxu0 %v642
        %v666 = vpop.f32.mrf.mxu0
        %v667 = vadd.f32 0.0, %v666
        %668 = vdwg.mxu0
        %669 = vmatpush.msra.mxu0 0.0
        %670 = vmatpush.msra.mxu0 0.0
        %671 = vmatpush.msra.mxu0 0.0
        %672 = vmatpush.msra.mxu0 0.0
        %673 = vmatpush.msra.mxu0 0.0
        %674 = vmatpush.msra.mxu0 0.0
        %675 = vmatpush.msra.mxu0 0.0
        %676 = vmatpush.msra.mxu0 0.0
        %677 = vmatpush.msra.mxu0 0.0
        %678 = vmatpush.msra.mxu0 0.0
        %679 = vmatpush.msra.mxu0 0.0
        %680 = vmatpush.msra.mxu0 0.0
        %681 = vmatpush.msra.mxu0 0.0
        %682 = vmatpush.msra.mxu0 0.0
        %683 = vmatpush.msra.mxu0 0.0
        %684 = vmatpush.msra.mxu0 %v647
        %685 = vmatmul.f32.gmra.mxu0 %v642
        %v686 = vpop.f32.mrf.mxu0
        %v687 = vadd.f32 0.0, %v686
        %688 = vdwg.mxu0
        %v689 = vadd.f32 %v629, %v667
        %v690 = vadd.f32 %v630, %v687
        %v691 = vmul.f32 %v323, %v323
        %v692 = vmul.f32 %v343, %v343
        %693 = vset.pattern.permute.xlu0 27
        %694 = vperm.xlu0 %693, %v197
        %v695 = vpop.permute.xlu0 %694
        %v697 = vperm.slane %v691, 5
        %v698 = vperm.slane %v692, 5
        %v699 = vmul.f32 %v695, %v697
        %v700 = vmul.f32 %v695, %v698
        %v701 = vadd.f32 %v689, %v699
        %v702 = vadd.f32 %v690, %v700
        %v703 = vmul.f32 %v396, %v394
        %v704 = vmul.f32 %v397, %v395
        %705 = vrot.lane.b32.xlu0 %v197, 100
        %v706 = vpop.permute.xlu0 %705
        %v707 = vsel %vm205, %v706, 0
        %v710 = vsel %vm402, %v703, 0
        %v713 = vsel %vm402, %v704, 0
        %715 = vmatpush.msra.mxu0 0.0
        %716 = vmatpush.msra.mxu0 0.0
        %717 = vmatpush.msra.mxu0 0.0
        %718 = vmatpush.msra.mxu0 0.0
        %719 = vmatpush.msra.mxu0 0.0
        %720 = vmatpush.msra.mxu0 0.0
        %721 = vmatpush.msra.mxu0 0.0
        %722 = vmatpush.msra.mxu0 0.0
        %723 = vmatpush.msra.mxu0 0.0
        %724 = vmatpush.msra.mxu0 0.0
        %725 = vmatpush.msra.mxu0 0.0
        %726 = vmatpush.msra.mxu0 0.0
        %727 = vmatpush.msra.mxu0 0.0
        %728 = vmatpush.msra.mxu0 0.0
        %729 = vmatpush.msra.mxu0 0.0
        %730 = vmatpush.msra.mxu0 %v710
        %731 = vmatmul.f32.gmra.mxu0 %v707
        %v732 = vpop.f32.mrf.mxu0
        %v733 = vadd.f32 0.0, %v732
        %734 = vdwg.mxu0
        %735 = vmatpush.msra.mxu0 0.0
        %736 = vmatpush.msra.mxu0 0.0
        %737 = vmatpush.msra.mxu0 0.0
        %738 = vmatpush.msra.mxu0 0.0
        %739 = vmatpush.msra.mxu0 0.0
        %740 = vmatpush.msra.mxu0 0.0
        %741 = vmatpush.msra.mxu0 0.0
        %742 = vmatpush.msra.mxu0 0.0
        %743 = vmatpush.msra.mxu0 0.0
        %744 = vmatpush.msra.mxu0 0.0
        %745 = vmatpush.msra.mxu0 0.0
        %746 = vmatpush.msra.mxu0 0.0
        %747 = vmatpush.msra.mxu0 0.0
        %748 = vmatpush.msra.mxu0 0.0
        %749 = vmatpush.msra.mxu0 0.0
        %750 = vmatpush.msra.mxu0 %v713
        %751 = vmatmul.f32.gmra.mxu0 %v707
        %v752 = vpop.f32.mrf.mxu0
        %v753 = vadd.f32 0.0, %v752
        %754 = vdwg.mxu0
        %v755 = vadd.f32 %v701, %v733
        %v756 = vadd.f32 %v702, %v753
        %v757 = vmul.f32 %v396, %v451
        %v758 = vmul.f32 %v397, %v452
        %759 = vrot.lane.b32.xlu0 %v197, 94
        %v760 = vpop.permute.xlu0 %759
        %v763 = vrot.slane %v757, 1
        %v764 = vrot.slane %v758, 1
        %v765 = vsel %vm461, %v760, 0
        %v767 = vsel %vm464, %v763, 0
        %v769 = vsel %vm464, %v764, 0
        %771 = vmatpush.msra.mxu0 0.0
        %772 = vmatpush.msra.mxu0 0.0
        %773 = vmatpush.msra.mxu0 0.0
        %774 = vmatpush.msra.mxu0 0.0
        %775 = vmatpush.msra.mxu0 0.0
        %776 = vmatpush.msra.mxu0 0.0
        %777 = vmatpush.msra.mxu0 0.0
        %778 = vmatpush.msra.mxu0 0.0
        %779 = vmatpush.msra.mxu0 0.0
        %780 = vmatpush.msra.mxu0 0.0
        %781 = vmatpush.msra.mxu0 0.0
        %782 = vmatpush.msra.mxu0 0.0
        %783 = vmatpush.msra.mxu0 0.0
        %784 = vmatpush.msra.mxu0 0.0
        %785 = vmatpush.msra.mxu0 0.0
        %786 = vmatpush.msra.mxu0 %v767
        %787 = vmatmul.f32.gmra.mxu0 %v765
        %v788 = vpop.f32.mrf.mxu0
        %v789 = vadd.f32 0.0, %v788
        %790 = vdwg.mxu0
        %791 = vmatpush.msra.mxu0 0.0
        %792 = vmatpush.msra.mxu0 0.0
        %793 = vmatpush.msra.mxu0 0.0
        %794 = vmatpush.msra.mxu0 0.0
        %795 = vmatpush.msra.mxu0 0.0
        %796 = vmatpush.msra.mxu0 0.0
        %797 = vmatpush.msra.mxu0 0.0
        %798 = vmatpush.msra.mxu0 0.0
        %799 = vmatpush.msra.mxu0 0.0
        %800 = vmatpush.msra.mxu0 0.0
        %801 = vmatpush.msra.mxu0 0.0
        %802 = vmatpush.msra.mxu0 0.0
        %803 = vmatpush.msra.mxu0 0.0
        %804 = vmatpush.msra.mxu0 0.0
        %805 = vmatpush.msra.mxu0 0.0
        %806 = vmatpush.msra.mxu0 %v769
        %807 = vmatmul.f32.gmra.mxu0 %v765
        %v808 = vpop.f32.mrf.mxu0
        %v809 = vadd.f32 0.0, %v808
        %810 = vdwg.mxu0
        %v811 = vadd.f32 %v755, %v789
        %v812 = vadd.f32 %v756, %v809
        %v813 = vmul.f32 %v396, %v511
        %v814 = vmul.f32 %v397, %v512
        %815 = vrot.lane.b32.xlu0 %v197, 89
        %v816 = vpop.permute.xlu0 %815
        %v819 = vrot.slane %v813, 2
        %v820 = vrot.slane %v814, 2
        %v821 = vsel %vm521, %v816, 0
        %v823 = vsel %vm524, %v819, 0
        %v825 = vsel %vm524, %v820, 0
        %827 = vmatpush.msra.mxu0 0.0
        %828 = vmatpush.msra.mxu0 0.0
        %829 = vmatpush.msra.mxu0 0.0
        %830 = vmatpush.msra.mxu0 0.0
        %831 = vmatpush.msra.mxu0 0.0
        %832 = vmatpush.msra.mxu0 0.0
        %833 = vmatpush.msra.mxu0 0.0
        %834 = vmatpush.msra.mxu0 0.0
        %835 = vmatpush.msra.mxu0 0.0
        %836 = vmatpush.msra.mxu0 0.0
        %837 = vmatpush.msra.mxu0 0.0
        %838 = vmatpush.msra.mxu0 0.0
        %839 = vmatpush.msra.mxu0 0.0
        %840 = vmatpush.msra.mxu0 0.0
        %841 = vmatpush.msra.mxu0 0.0
        %842 = vmatpush.msra.mxu0 %v823
        %843 = vmatmul.f32.gmra.mxu0 %v821
        %v844 = vpop.f32.mrf.mxu0
        %v845 = vadd.f32 0.0, %v844
        %846 = vdwg.mxu0
        %847 = vmatpush.msra.mxu0 0.0
        %848 = vmatpush.msra.mxu0 0.0
        %849 = vmatpush.msra.mxu0 0.0
        %850 = vmatpush.msra.mxu0 0.0
        %851 = vmatpush.msra.mxu0 0.0
        %852 = vmatpush.msra.mxu0 0.0
        %853 = vmatpush.msra.mxu0 0.0
        %854 = vmatpush.msra.mxu0 0.0
        %855 = vmatpush.msra.mxu0 0.0
        %856 = vmatpush.msra.mxu0 0.0
        %857 = vmatpush.msra.mxu0 0.0
        %858 = vmatpush.msra.mxu0 0.0
        %859 = vmatpush.msra.mxu0 0.0
        %860 = vmatpush.msra.mxu0 0.0
        %861 = vmatpush.msra.mxu0 0.0
        %862 = vmatpush.msra.mxu0 %v825
        %863 = vmatmul.f32.gmra.mxu0 %v821
        %v864 = vpop.f32.mrf.mxu0
        %v865 = vadd.f32 0.0, %v864
        %866 = vdwg.mxu0
        %v867 = vadd.f32 %v811, %v845
        %v868 = vadd.f32 %v812, %v865
        %v869 = vmul.f32 %v396, %v571
        %v870 = vmul.f32 %v397, %v572
        %871 = vrot.lane.b32.xlu0 %v197, 85
        %v872 = vpop.permute.xlu0 %871
        %v875 = vrot.slane %v869, 3
        %v876 = vrot.slane %v870, 3
        %v877 = vsel %vm581, %v872, 0
        %v879 = vsel %vm584, %v875, 0
        %v881 = vsel %vm584, %v876, 0
        %883 = vmatpush.msra.mxu0 0.0
        %884 = vmatpush.msra.mxu0 0.0
        %885 = vmatpush.msra.mxu0 0.0
        %886 = vmatpush.msra.mxu0 0.0
        %887 = vmatpush.msra.mxu0 0.0
        %888 = vmatpush.msra.mxu0 0.0
        %889 = vmatpush.msra.mxu0 0.0
        %890 = vmatpush.msra.mxu0 0.0
        %891 = vmatpush.msra.mxu0 0.0
        %892 = vmatpush.msra.mxu0 0.0
        %893 = vmatpush.msra.mxu0 0.0
        %894 = vmatpush.msra.mxu0 0.0
        %895 = vmatpush.msra.mxu0 0.0
        %896 = vmatpush.msra.mxu0 0.0
        %897 = vmatpush.msra.mxu0 0.0
        %898 = vmatpush.msra.mxu0 %v879
        %899 = vmatmul.f32.gmra.mxu0 %v877
        %v900 = vpop.f32.mrf.mxu0
        %v901 = vadd.f32 0.0, %v900
        %902 = vdwg.mxu0
        %903 = vmatpush.msra.mxu0 0.0
        %904 = vmatpush.msra.mxu0 0.0
        %905 = vmatpush.msra.mxu0 0.0
        %906 = vmatpush.msra.mxu0 0.0
        %907 = vmatpush.msra.mxu0 0.0
        %908 = vmatpush.msra.mxu0 0.0
        %909 = vmatpush.msra.mxu0 0.0
        %910 = vmatpush.msra.mxu0 0.0
        %911 = vmatpush.msra.mxu0 0.0
        %912 = vmatpush.msra.mxu0 0.0
        %913 = vmatpush.msra.mxu0 0.0
        %914 = vmatpush.msra.mxu0 0.0
        %915 = vmatpush.msra.mxu0 0.0
        %916 = vmatpush.msra.mxu0 0.0
        %917 = vmatpush.msra.mxu0 0.0
        %918 = vmatpush.msra.mxu0 %v881
        %919 = vmatmul.f32.gmra.mxu0 %v877
        %v920 = vpop.f32.mrf.mxu0
        %v921 = vadd.f32 0.0, %v920
        %922 = vdwg.mxu0
        %v923 = vadd.f32 %v867, %v901
        %v924 = vadd.f32 %v868, %v921
        %v925 = vmul.f32 %v396, %v631
        %v926 = vmul.f32 %v397, %v632
        %927 = vrot.lane.b32.xlu0 %v197, 82
        %v928 = vpop.permute.xlu0 %927
        %v931 = vrot.slane %v925, 4
        %v932 = vrot.slane %v926, 4
        %v933 = vsel %vm641, %v928, 0
        %v935 = vsel %vm644, %v931, 0
        %v937 = vsel %vm644, %v932, 0
        %939 = vmatpush.msra.mxu0 0.0
        %940 = vmatpush.msra.mxu0 0.0
        %941 = vmatpush.msra.mxu0 0.0
        %942 = vmatpush.msra.mxu0 0.0
        %943 = vmatpush.msra.mxu0 0.0
        %944 = vmatpush.msra.mxu0 0.0
        %945 = vmatpush.msra.mxu0 0.0
        %946 = vmatpush.msra.mxu0 0.0
        %947 = vmatpush.msra.mxu0 0.0
        %948 = vmatpush.msra.mxu0 0.0
        %949 = vmatpush.msra.mxu0 0.0
        %950 = vmatpush.msra.mxu0 0.0
        %951 = vmatpush.msra.mxu0 0.0
        %952 = vmatpush.msra.mxu0 0.0
        %953 = vmatpush.msra.mxu0 0.0
        %954 = vmatpush.msra.mxu0 %v935
        %955 = vmatmul.f32.gmra.mxu0 %v933
        %v956 = vpop.f32.mrf.mxu0
        %v957 = vadd.f32 0.0, %v956
        %958 = vdwg.mxu0
        %959 = vmatpush.msra.mxu0 0.0
        %960 = vmatpush.msra.mxu0 0.0
        %961 = vmatpush.msra.mxu0 0.0
        %962 = vmatpush.msra.mxu0 0.0
        %963 = vmatpush.msra.mxu0 0.0
        %964 = vmatpush.msra.mxu0 0.0
        %965 = vmatpush.msra.mxu0 0.0
        %966 = vmatpush.msra.mxu0 0.0
        %967 = vmatpush.msra.mxu0 0.0
        %968 = vmatpush.msra.mxu0 0.0
        %969 = vmatpush.msra.mxu0 0.0
        %970 = vmatpush.msra.mxu0 0.0
        %971 = vmatpush.msra.mxu0 0.0
        %972 = vmatpush.msra.mxu0 0.0
        %973 = vmatpush.msra.mxu0 0.0
        %974 = vmatpush.msra.mxu0 %v937
        %975 = vmatmul.f32.gmra.mxu0 %v933
        %v976 = vpop.f32.mrf.mxu0
        %v977 = vadd.f32 0.0, %v976
        %978 = vdwg.mxu0
        %v979 = vadd.f32 %v923, %v957
        %v980 = vadd.f32 %v924, %v977
        %v983 = vrot.slane %v323, 3
        %v984 = vrot.slane %v343, 3
        %v987 = vmul.f32 %v323, %v983
        %v988 = vmul.f32 %v343, %v984
        %v989 = vmul.f32 %v987, %v323
        %v990 = vmul.f32 %v988, %v343
        %991 = vset.pattern.permute.xlu0 48
        %992 = vperm.xlu0 %991, %v197
        %v993 = vpop.permute.xlu0 %992
        %v995 = vperm.slane %v989, 5
        %v996 = vperm.slane %v990, 5
        %v997 = vmul.f32 %v993, %v995
        %v998 = vmul.f32 %v993, %v996
        %v999 = vadd.f32 %v979, %v997
        %v1000 = vadd.f32 %v980, %v998
        %v1001 = vmul.f32 %v453, %v451
        %v1002 = vmul.f32 %v454, %v452
        %1003 = vrot.lane.b32.xlu0 %v197, 79
        %v1004 = vpop.permute.xlu0 %1003
        %v1007 = vrot.slane %v1001, 1
        %v1008 = vrot.slane %v1002, 1
        %v1009 = vsel %vm461, %v1004, 0
        %v1011 = vsel %vm464, %v1007, 0
        %v1013 = vsel %vm464, %v1008, 0
        %1015 = vmatpush.msra.mxu0 0.0
        %1016 = vmatpush.msra.mxu0 0.0
        %1017 = vmatpush.msra.mxu0 0.0
        %1018 = vmatpush.msra.mxu0 0.0
        %1019 = vmatpush.msra.mxu0 0.0
        %1020 = vmatpush.msra.mxu0 0.0
        %1021 = vmatpush.msra.mxu0 0.0
        %1022 = vmatpush.msra.mxu0 0.0
        %1023 = vmatpush.msra.mxu0 0.0
        %1024 = vmatpush.msra.mxu0 0.0
        %1025 = vmatpush.msra.mxu0 0.0
        %1026 = vmatpush.msra.mxu0 0.0
        %1027 = vmatpush.msra.mxu0 0.0
        %1028 = vmatpush.msra.mxu0 0.0
        %1029 = vmatpush.msra.mxu0 0.0
        %1030 = vmatpush.msra.mxu0 %v1011
        %1031 = vmatmul.f32.gmra.mxu0 %v1009
        %v1032 = vpop.f32.mrf.mxu0
        %v1033 = vadd.f32 0.0, %v1032
        %1034 = vdwg.mxu0
        %1035 = vmatpush.msra.mxu0 0.0
        %1036 = vmatpush.msra.mxu0 0.0
        %1037 = vmatpush.msra.mxu0 0.0
        %1038 = vmatpush.msra.mxu0 0.0
        %1039 = vmatpush.msra.mxu0 0.0
        %1040 = vmatpush.msra.mxu0 0.0
        %1041 = vmatpush.msra.mxu0 0.0
        %1042 = vmatpush.msra.mxu0 0.0
        %1043 = vmatpush.msra.mxu0 0.0
        %1044 = vmatpush.msra.mxu0 0.0
        %1045 = vmatpush.msra.mxu0 0.0
        %1046 = vmatpush.msra.mxu0 0.0
        %1047 = vmatpush.msra.mxu0 0.0
        %1048 = vmatpush.msra.mxu0 0.0
        %1049 = vmatpush.msra.mxu0 0.0
        %1050 = vmatpush.msra.mxu0 %v1013
        %1051 = vmatmul.f32.gmra.mxu0 %v1009
        %v1052 = vpop.f32.mrf.mxu0
        %v1053 = vadd.f32 0.0, %v1052
        %1054 = vdwg.mxu0
        %v1055 = vadd.f32 %v999, %v1033
        %v1056 = vadd.f32 %v1000, %v1053
        %v1057 = vmul.f32 %v453, %v511
        %v1058 = vmul.f32 %v454, %v512
        %1059 = vrot.lane.b32.xlu0 %v197, 74
        %v1060 = vpop.permute.xlu0 %1059
        %v1063 = vrot.slane %v1057, 2
        %v1064 = vrot.slane %v1058, 2
        %v1065 = vsel %vm521, %v1060, 0
        %v1067 = vsel %vm524, %v1063, 0
        %v1069 = vsel %vm524, %v1064, 0
        %1071 = vmatpush.msra.mxu0 0.0
        %1072 = vmatpush.msra.mxu0 0.0
        %1073 = vmatpush.msra.mxu0 0.0
        %1074 = vmatpush.msra.mxu0 0.0
        %1075 = vmatpush.msra.mxu0 0.0
        %1076 = vmatpush.msra.mxu0 0.0
        %1077 = vmatpush.msra.mxu0 0.0
        %1078 = vmatpush.msra.mxu0 0.0
        %1079 = vmatpush.msra.mxu0 0.0
        %1080 = vmatpush.msra.mxu0 0.0
        %1081 = vmatpush.msra.mxu0 0.0
        %1082 = vmatpush.msra.mxu0 0.0
        %1083 = vmatpush.msra.mxu0 0.0
        %1084 = vmatpush.msra.mxu0 0.0
        %1085 = vmatpush.msra.mxu0 0.0
        %1086 = vmatpush.msra.mxu0 %v1067
        %1087 = vmatmul.f32.gmra.mxu0 %v1065
        %v1088 = vpop.f32.mrf.mxu0
        %v1089 = vadd.f32 0.0, %v1088
        %1090 = vdwg.mxu0
        %1091 = vmatpush.msra.mxu0 0.0
        %1092 = vmatpush.msra.mxu0 0.0
        %1093 = vmatpush.msra.mxu0 0.0
        %1094 = vmatpush.msra.mxu0 0.0
        %1095 = vmatpush.msra.mxu0 0.0
        %1096 = vmatpush.msra.mxu0 0.0
        %1097 = vmatpush.msra.mxu0 0.0
        %1098 = vmatpush.msra.mxu0 0.0
        %1099 = vmatpush.msra.mxu0 0.0
        %1100 = vmatpush.msra.mxu0 0.0
        %1101 = vmatpush.msra.mxu0 0.0
        %1102 = vmatpush.msra.mxu0 0.0
        %1103 = vmatpush.msra.mxu0 0.0
        %1104 = vmatpush.msra.mxu0 0.0
        %1105 = vmatpush.msra.mxu0 0.0
        %1106 = vmatpush.msra.mxu0 %v1069
        %1107 = vmatmul.f32.gmra.mxu0 %v1065
        %v1108 = vpop.f32.mrf.mxu0
        %v1109 = vadd.f32 0.0, %v1108
        %1110 = vdwg.mxu0
        %v1111 = vadd.f32 %v1055, %v1089
        %v1112 = vadd.f32 %v1056, %v1109
        %v1113 = vmul.f32 %v453, %v571
        %v1114 = vmul.f32 %v454, %v572
        %1115 = vrot.lane.b32.xlu0 %v197, 70
        %v1116 = vpop.permute.xlu0 %1115
        %v1119 = vrot.slane %v1113, 3
        %v1120 = vrot.slane %v1114, 3
        %v1121 = vsel %vm581, %v1116, 0
        %v1123 = vsel %vm584, %v1119, 0
        %v1125 = vsel %vm584, %v1120, 0
        %1127 = vmatpush.msra.mxu0 0.0
        %1128 = vmatpush.msra.mxu0 0.0
        %1129 = vmatpush.msra.mxu0 0.0
        %1130 = vmatpush.msra.mxu0 0.0
        %1131 = vmatpush.msra.mxu0 0.0
        %1132 = vmatpush.msra.mxu0 0.0
        %1133 = vmatpush.msra.mxu0 0.0
        %1134 = vmatpush.msra.mxu0 0.0
        %1135 = vmatpush.msra.mxu0 0.0
        %1136 = vmatpush.msra.mxu0 0.0
        %1137 = vmatpush.msra.mxu0 0.0
        %1138 = vmatpush.msra.mxu0 0.0
        %1139 = vmatpush.msra.mxu0 0.0
        %1140 = vmatpush.msra.mxu0 0.0
        %1141 = vmatpush.msra.mxu0 0.0
        %1142 = vmatpush.msra.mxu0 %v1123
        %1143 = vmatmul.f32.gmra.mxu0 %v1121
        %v1144 = vpop.f32.mrf.mxu0
        %v1145 = vadd.f32 0.0, %v1144
        %1146 = vdwg.mxu0
        %1147 = vmatpush.msra.mxu0 0.0
        %1148 = vmatpush.msra.mxu0 0.0
        %1149 = vmatpush.msra.mxu0 0.0
        %1150 = vmatpush.msra.mxu0 0.0
        %1151 = vmatpush.msra.mxu0 0.0
        %1152 = vmatpush.msra.mxu0 0.0
        %1153 = vmatpush.msra.mxu0 0.0
        %1154 = vmatpush.msra.mxu0 0.0
        %1155 = vmatpush.msra.mxu0 0.0
        %1156 = vmatpush.msra.mxu0 0.0
        %1157 = vmatpush.msra.mxu0 0.0
        %1158 = vmatpush.msra.mxu0 0.0
        %1159 = vmatpush.msra.mxu0 0.0
        %1160 = vmatpush.msra.mxu0 0.0
        %1161 = vmatpush.msra.mxu0 0.0
        %1162 = vmatpush.msra.mxu0 %v1125
        %1163 = vmatmul.f32.gmra.mxu0 %v1121
        %v1164 = vpop.f32.mrf.mxu0
        %v1165 = vadd.f32 0.0, %v1164
        %1166 = vdwg.mxu0
        %v1167 = vadd.f32 %v1111, %v1145
        %v1168 = vadd.f32 %v1112, %v1165
        %v1169 = vmul.f32 %v453, %v631
        %v1170 = vmul.f32 %v454, %v632
        %1171 = vrot.lane.b32.xlu0 %v197, 67
        %v1172 = vpop.permute.xlu0 %1171
        %v1175 = vrot.slane %v1169, 4
        %v1176 = vrot.slane %v1170, 4
        %v1177 = vsel %vm641, %v1172, 0
        %v1179 = vsel %vm644, %v1175, 0
        %v1181 = vsel %vm644, %v1176, 0
        %1183 = vmatpush.msra.mxu0 0.0
        %1184 = vmatpush.msra.mxu0 0.0
        %1185 = vmatpush.msra.mxu0 0.0
        %1186 = vmatpush.msra.mxu0 0.0
        %1187 = vmatpush.msra.mxu0 0.0
        %1188 = vmatpush.msra.mxu0 0.0
        %1189 = vmatpush.msra.mxu0 0.0
        %1190 = vmatpush.msra.mxu0 0.0
        %1191 = vmatpush.msra.mxu0 0.0
        %1192 = vmatpush.msra.mxu0 0.0
        %1193 = vmatpush.msra.mxu0 0.0
        %1194 = vmatpush.msra.mxu0 0.0
        %1195 = vmatpush.msra.mxu0 0.0
        %1196 = vmatpush.msra.mxu0 0.0
        %1197 = vmatpush.msra.mxu0 0.0
        %1198 = vmatpush.msra.mxu0 %v1179
        %1199 = vmatmul.f32.gmra.mxu0 %v1177
        %v1200 = vpop.f32.mrf.mxu0
        %v1201 = vadd.f32 0.0, %v1200
        %1202 = vdwg.mxu0
        %1203 = vmatpush.msra.mxu0 0.0
        %1204 = vmatpush.msra.mxu0 0.0
        %1205 = vmatpush.msra.mxu0 0.0
        %1206 = vmatpush.msra.mxu0 0.0
        %1207 = vmatpush.msra.mxu0 0.0
        %1208 = vmatpush.msra.mxu0 0.0
        %1209 = vmatpush.msra.mxu0 0.0
        %1210 = vmatpush.msra.mxu0 0.0
        %1211 = vmatpush.msra.mxu0 0.0
        %1212 = vmatpush.msra.mxu0 0.0
        %1213 = vmatpush.msra.mxu0 0.0
        %1214 = vmatpush.msra.mxu0 0.0
        %1215 = vmatpush.msra.mxu0 0.0
        %1216 = vmatpush.msra.mxu0 0.0
        %1217 = vmatpush.msra.mxu0 0.0
        %1218 = vmatpush.msra.mxu0 %v1181
        %1219 = vmatmul.f32.gmra.mxu0 %v1177
        %v1220 = vpop.f32.mrf.mxu0
        %v1221 = vadd.f32 0.0, %v1220
        %1222 = vdwg.mxu0
        %v1223 = vadd.f32 %v1167, %v1201
        %v1224 = vadd.f32 %v1168, %v1221
        %v1225 = vrot.slane %v323, 4
        %v1226 = vrot.slane %v343, 4
        %v1229 = vmul.f32 %v323, %v1225
        %v1230 = vmul.f32 %v343, %v1226
        %v1231 = vmul.f32 %v1229, %v323
        %v1232 = vmul.f32 %v1230, %v343
        %1233 = vset.pattern.permute.xlu0 63
        %1234 = vperm.xlu0 %1233, %v197
        %v1235 = vpop.permute.xlu0 %1234
        %v1237 = vperm.slane %v1231, 5
        %v1238 = vperm.slane %v1232, 5
        %v1239 = vmul.f32 %v1235, %v1237
        %v1240 = vmul.f32 %v1235, %v1238
        %v1241 = vadd.f32 %v1223, %v1239
        %v1242 = vadd.f32 %v1224, %v1240
        %v1243 = vmul.f32 %v513, %v511
        %v1244 = vmul.f32 %v514, %v512
        %1245 = vrot.lane.b32.xlu0 %v197, 64
        %v1246 = vpop.permute.xlu0 %1245
        %v1249 = vrot.slane %v1243, 2
        %v1250 = vrot.slane %v1244, 2
        %v1251 = vsel %vm521, %v1246, 0
        %v1253 = vsel %vm524, %v1249, 0
        %v1255 = vsel %vm524, %v1250, 0
        %1257 = vmatpush.msra.mxu0 0.0
        %1258 = vmatpush.msra.mxu0 0.0
        %1259 = vmatpush.msra.mxu0 0.0
        %1260 = vmatpush.msra.mxu0 0.0
        %1261 = vmatpush.msra.mxu0 0.0
        %1262 = vmatpush.msra.mxu0 0.0
        %1263 = vmatpush.msra.mxu0 0.0
        %1264 = vmatpush.msra.mxu0 0.0
        %1265 = vmatpush.msra.mxu0 0.0
        %1266 = vmatpush.msra.mxu0 0.0
        %1267 = vmatpush.msra.mxu0 0.0
        %1268 = vmatpush.msra.mxu0 0.0
        %1269 = vmatpush.msra.mxu0 0.0
        %1270 = vmatpush.msra.mxu0 0.0
        %1271 = vmatpush.msra.mxu0 0.0
        %1272 = vmatpush.msra.mxu0 %v1253
        %1273 = vmatmul.f32.gmra.mxu0 %v1251
        %v1274 = vpop.f32.mrf.mxu0
        %v1275 = vadd.f32 0.0, %v1274
        %1276 = vdwg.mxu0
        %1277 = vmatpush.msra.mxu0 0.0
        %1278 = vmatpush.msra.mxu0 0.0
        %1279 = vmatpush.msra.mxu0 0.0
        %1280 = vmatpush.msra.mxu0 0.0
        %1281 = vmatpush.msra.mxu0 0.0
        %1282 = vmatpush.msra.mxu0 0.0
        %1283 = vmatpush.msra.mxu0 0.0
        %1284 = vmatpush.msra.mxu0 0.0
        %1285 = vmatpush.msra.mxu0 0.0
        %1286 = vmatpush.msra.mxu0 0.0
        %1287 = vmatpush.msra.mxu0 0.0
        %1288 = vmatpush.msra.mxu0 0.0
        %1289 = vmatpush.msra.mxu0 0.0
        %1290 = vmatpush.msra.mxu0 0.0
        %1291 = vmatpush.msra.mxu0 0.0
        %1292 = vmatpush.msra.mxu0 %v1255
        %1293 = vmatmul.f32.gmra.mxu0 %v1251
        %v1294 = vpop.f32.mrf.mxu0
        %v1295 = vadd.f32 0.0, %v1294
        %1296 = vdwg.mxu0
        %v1297 = vadd.f32 %v1241, %v1275
        %v1298 = vadd.f32 %v1242, %v1295
        %v1299 = vmul.f32 %v513, %v571
        %v1300 = vmul.f32 %v514, %v572
        %1301 = vrot.lane.b32.xlu0 %v197, 60
        %v1302 = vpop.permute.xlu0 %1301
        %v1305 = vrot.slane %v1299, 3
        %v1306 = vrot.slane %v1300, 3
        %v1307 = vsel %vm581, %v1302, 0
        %v1309 = vsel %vm584, %v1305, 0
        %v1311 = vsel %vm584, %v1306, 0
        %1313 = vmatpush.msra.mxu0 0.0
        %1314 = vmatpush.msra.mxu0 0.0
        %1315 = vmatpush.msra.mxu0 0.0
        %1316 = vmatpush.msra.mxu0 0.0
        %1317 = vmatpush.msra.mxu0 0.0
        %1318 = vmatpush.msra.mxu0 0.0
        %1319 = vmatpush.msra.mxu0 0.0
        %1320 = vmatpush.msra.mxu0 0.0
        %1321 = vmatpush.msra.mxu0 0.0
        %1322 = vmatpush.msra.mxu0 0.0
        %1323 = vmatpush.msra.mxu0 0.0
        %1324 = vmatpush.msra.mxu0 0.0
        %1325 = vmatpush.msra.mxu0 0.0
        %1326 = vmatpush.msra.mxu0 0.0
        %1327 = vmatpush.msra.mxu0 0.0
        %1328 = vmatpush.msra.mxu0 %v1309
        %1329 = vmatmul.f32.gmra.mxu0 %v1307
        %v1330 = vpop.f32.mrf.mxu0
        %v1331 = vadd.f32 0.0, %v1330
        %1332 = vdwg.mxu0
        %1333 = vmatpush.msra.mxu0 0.0
        %1334 = vmatpush.msra.mxu0 0.0
        %1335 = vmatpush.msra.mxu0 0.0
        %1336 = vmatpush.msra.mxu0 0.0
        %1337 = vmatpush.msra.mxu0 0.0
        %1338 = vmatpush.msra.mxu0 0.0
        %1339 = vmatpush.msra.mxu0 0.0
        %1340 = vmatpush.msra.mxu0 0.0
        %1341 = vmatpush.msra.mxu0 0.0
        %1342 = vmatpush.msra.mxu0 0.0
        %1343 = vmatpush.msra.mxu0 0.0
        %1344 = vmatpush.msra.mxu0 0.0
        %1345 = vmatpush.msra.mxu0 0.0
        %1346 = vmatpush.msra.mxu0 0.0
        %1347 = vmatpush.msra.mxu0 0.0
        %1348 = vmatpush.msra.mxu0 %v1311
        %1349 = vmatmul.f32.gmra.mxu0 %v1307
        %v1350 = vpop.f32.mrf.mxu0
        %v1351 = vadd.f32 0.0, %v1350
        %1352 = vdwg.mxu0
        %v1353 = vadd.f32 %v1297, %v1331
        %v1354 = vadd.f32 %v1298, %v1351
        %v1355 = vmul.f32 %v513, %v631
        %v1356 = vmul.f32 %v514, %v632
        %1357 = vrot.lane.b32.xlu0 %v197, 57
        %v1358 = vpop.permute.xlu0 %1357
        %v1361 = vrot.slane %v1355, 4
        %v1362 = vrot.slane %v1356, 4
        %v1363 = vsel %vm641, %v1358, 0
        %v1365 = vsel %vm644, %v1361, 0
        %v1367 = vsel %vm644, %v1362, 0
        %1369 = vmatpush.msra.mxu0 0.0
        %1370 = vmatpush.msra.mxu0 0.0
        %1371 = vmatpush.msra.mxu0 0.0
        %1372 = vmatpush.msra.mxu0 0.0
        %1373 = vmatpush.msra.mxu0 0.0
        %1374 = vmatpush.msra.mxu0 0.0
        %1375 = vmatpush.msra.mxu0 0.0
        %1376 = vmatpush.msra.mxu0 0.0
        %1377 = vmatpush.msra.mxu0 0.0
        %1378 = vmatpush.msra.mxu0 0.0
        %1379 = vmatpush.msra.mxu0 0.0
        %1380 = vmatpush.msra.mxu0 0.0
        %1381 = vmatpush.msra.mxu0 0.0
        %1382 = vmatpush.msra.mxu0 0.0
        %1383 = vmatpush.msra.mxu0 0.0
        %1384 = vmatpush.msra.mxu0 %v1365
        %1385 = vmatmul.f32.gmra.mxu0 %v1363
        %v1386 = vpop.f32.mrf.mxu0
        %v1387 = vadd.f32 0.0, %v1386
        %1388 = vdwg.mxu0
        %1389 = vmatpush.msra.mxu0 0.0
        %1390 = vmatpush.msra.mxu0 0.0
        %1391 = vmatpush.msra.mxu0 0.0
        %1392 = vmatpush.msra.mxu0 0.0
        %1393 = vmatpush.msra.mxu0 0.0
        %1394 = vmatpush.msra.mxu0 0.0
        %1395 = vmatpush.msra.mxu0 0.0
        %1396 = vmatpush.msra.mxu0 0.0
        %1397 = vmatpush.msra.mxu0 0.0
        %1398 = vmatpush.msra.mxu0 0.0
        %1399 = vmatpush.msra.mxu0 0.0
        %1400 = vmatpush.msra.mxu0 0.0
        %1401 = vmatpush.msra.mxu0 0.0
        %1402 = vmatpush.msra.mxu0 0.0
        %1403 = vmatpush.msra.mxu0 0.0
        %1404 = vmatpush.msra.mxu0 %v1367
        %1405 = vmatmul.f32.gmra.mxu0 %v1363
        %v1406 = vpop.f32.mrf.mxu0
        %v1407 = vadd.f32 0.0, %v1406
        %1408 = vdwg.mxu0
        %v1409 = vadd.f32 %v1353, %v1387
        %v1410 = vadd.f32 %v1354, %v1407
        %v1411 = vrot.slane %v323, 5
        %v1412 = vrot.slane %v343, 5
        %v1415 = vmul.f32 %v323, %v1411
        %v1416 = vmul.f32 %v343, %v1412
        %v1417 = vmul.f32 %v1415, %v323
        %v1418 = vmul.f32 %v1416, %v343
        %1419 = vset.pattern.permute.xlu0 73
        %1420 = vperm.xlu0 %1419, %v197
        %v1421 = vpop.permute.xlu0 %1420
        %v1423 = vperm.slane %v1417, 5
        %v1424 = vperm.slane %v1418, 5
        %v1425 = vmul.f32 %v1421, %v1423
        %v1426 = vmul.f32 %v1421, %v1424
        %v1427 = vadd.f32 %v1409, %v1425
        %v1428 = vadd.f32 %v1410, %v1426
        %v1429 = vmul.f32 %v573, %v571
        %v1430 = vmul.f32 %v574, %v572
        %1431 = vrot.lane.b32.xlu0 %v197, 54
        %v1432 = vpop.permute.xlu0 %1431
        %v1435 = vrot.slane %v1429, 3
        %v1436 = vrot.slane %v1430, 3
        %v1437 = vsel %vm581, %v1432, 0
        %v1439 = vsel %vm584, %v1435, 0
        %v1441 = vsel %vm584, %v1436, 0
        %1443 = vmatpush.msra.mxu0 0.0
        %1444 = vmatpush.msra.mxu0 0.0
        %1445 = vmatpush.msra.mxu0 0.0
        %1446 = vmatpush.msra.mxu0 0.0
        %1447 = vmatpush.msra.mxu0 0.0
        %1448 = vmatpush.msra.mxu0 0.0
        %1449 = vmatpush.msra.mxu0 0.0
        %1450 = vmatpush.msra.mxu0 0.0
        %1451 = vmatpush.msra.mxu0 0.0
        %1452 = vmatpush.msra.mxu0 0.0
        %1453 = vmatpush.msra.mxu0 0.0
        %1454 = vmatpush.msra.mxu0 0.0
        %1455 = vmatpush.msra.mxu0 0.0
        %1456 = vmatpush.msra.mxu0 0.0
        %1457 = vmatpush.msra.mxu0 0.0
        %1458 = vmatpush.msra.mxu0 %v1439
        %1459 = vmatmul.f32.gmra.mxu0 %v1437
        %v1460 = vpop.f32.mrf.mxu0
        %v1461 = vadd.f32 0.0, %v1460
        %1462 = vdwg.mxu0
        %1463 = vmatpush.msra.mxu0 0.0
        %1464 = vmatpush.msra.mxu0 0.0
        %1465 = vmatpush.msra.mxu0 0.0
        %1466 = vmatpush.msra.mxu0 0.0
        %1467 = vmatpush.msra.mxu0 0.0
        %1468 = vmatpush.msra.mxu0 0.0
        %1469 = vmatpush.msra.mxu0 0.0
        %1470 = vmatpush.msra.mxu0 0.0
        %1471 = vmatpush.msra.mxu0 0.0
        %1472 = vmatpush.msra.mxu0 0.0
        %1473 = vmatpush.msra.mxu0 0.0
        %1474 = vmatpush.msra.mxu0 0.0
        %1475 = vmatpush.msra.mxu0 0.0
        %1476 = vmatpush.msra.mxu0 0.0
        %1477 = vmatpush.msra.mxu0 0.0
        %1478 = vmatpush.msra.mxu0 %v1441
        %1479 = vmatmul.f32.gmra.mxu0 %v1437
        %v1480 = vpop.f32.mrf.mxu0
        %v1481 = vadd.f32 0.0, %v1480
        %1482 = vdwg.mxu0
        %v1483 = vadd.f32 %v1427, %v1461
        %v1484 = vadd.f32 %v1428, %v1481
        %v1485 = vmul.f32 %v573, %v631
        %v1486 = vmul.f32 %v574, %v632
        %1487 = vrot.lane.b32.xlu0 %v197, 51
        %v1488 = vpop.permute.xlu0 %1487
        %v1491 = vrot.slane %v1485, 4
        %v1492 = vrot.slane %v1486, 4
        %v1493 = vsel %vm641, %v1488, 0
        %v1495 = vsel %vm644, %v1491, 0
        %v1497 = vsel %vm644, %v1492, 0
        %1499 = vmatpush.msra.mxu0 0.0
        %1500 = vmatpush.msra.mxu0 0.0
        %1501 = vmatpush.msra.mxu0 0.0
        %1502 = vmatpush.msra.mxu0 0.0
        %1503 = vmatpush.msra.mxu0 0.0
        %1504 = vmatpush.msra.mxu0 0.0
        %1505 = vmatpush.msra.mxu0 0.0
        %1506 = vmatpush.msra.mxu0 0.0
        %1507 = vmatpush.msra.mxu0 0.0
        %1508 = vmatpush.msra.mxu0 0.0
        %1509 = vmatpush.msra.mxu0 0.0
        %1510 = vmatpush.msra.mxu0 0.0
        %1511 = vmatpush.msra.mxu0 0.0
        %1512 = vmatpush.msra.mxu0 0.0
        %1513 = vmatpush.msra.mxu0 0.0
        %1514 = vmatpush.msra.mxu0 %v1495
        %1515 = vmatmul.f32.gmra.mxu0 %v1493
        %v1516 = vpop.f32.mrf.mxu0
        %v1517 = vadd.f32 0.0, %v1516
        %1518 = vdwg.mxu0
        %1519 = vmatpush.msra.mxu0 0.0
        %1520 = vmatpush.msra.mxu0 0.0
        %1521 = vmatpush.msra.mxu0 0.0
        %1522 = vmatpush.msra.mxu0 0.0
        %1523 = vmatpush.msra.mxu0 0.0
        %1524 = vmatpush.msra.mxu0 0.0
        %1525 = vmatpush.msra.mxu0 0.0
        %1526 = vmatpush.msra.mxu0 0.0
        %1527 = vmatpush.msra.mxu0 0.0
        %1528 = vmatpush.msra.mxu0 0.0
        %1529 = vmatpush.msra.mxu0 0.0
        %1530 = vmatpush.msra.mxu0 0.0
        %1531 = vmatpush.msra.mxu0 0.0
        %1532 = vmatpush.msra.mxu0 0.0
        %1533 = vmatpush.msra.mxu0 0.0
        %1534 = vmatpush.msra.mxu0 %v1497
        %1535 = vmatmul.f32.gmra.mxu0 %v1493
        %v1536 = vpop.f32.mrf.mxu0
        %v1537 = vadd.f32 0.0, %v1536
        %1538 = vdwg.mxu0
        %v1539 = vadd.f32 %v1483, %v1517
        %v1540 = vadd.f32 %v1484, %v1537
        %v1541 = vrot.slane %v323, 6
        %v1542 = vrot.slane %v343, 6
        %v1545 = vmul.f32 %v323, %v1541
        %v1546 = vmul.f32 %v343, %v1542
        %v1547 = vmul.f32 %v1545, %v323
        %v1548 = vmul.f32 %v1546, %v343
        %1549 = vset.pattern.permute.xlu0 79
        %1550 = vperm.xlu0 %1549, %v197
        %v1551 = vpop.permute.xlu0 %1550
        %v1553 = vperm.slane %v1547, 5
        %v1554 = vperm.slane %v1548, 5
        %v1555 = vmul.f32 %v1551, %v1553
        %v1556 = vmul.f32 %v1551, %v1554
        %v1557 = vadd.f32 %v1539, %v1555
        %v1558 = vadd.f32 %v1540, %v1556
        %v1559 = vmul.f32 %v633, %v631
        %v1560 = vmul.f32 %v634, %v632
        %1561 = vrot.lane.b32.xlu0 %v197, 48
        %v1562 = vpop.permute.xlu0 %1561
        %v1565 = vrot.slane %v1559, 4
        %v1566 = vrot.slane %v1560, 4
        %v1567 = vsel %vm641, %v1562, 0
        %v1569 = vsel %vm644, %v1565, 0
        %v1571 = vsel %vm644, %v1566, 0
        %1573 = vmatpush.msra.mxu0 0.0
        %1574 = vmatpush.msra.mxu0 0.0
        %1575 = vmatpush.msra.mxu0 0.0
        %1576 = vmatpush.msra.mxu0 0.0
        %1577 = vmatpush.msra.mxu0 0.0
        %1578 = vmatpush.msra.mxu0 0.0
        %1579 = vmatpush.msra.mxu0 0.0
        %1580 = vmatpush.msra.mxu0 0.0
        %1581 = vmatpush.msra.mxu0 0.0
        %1582 = vmatpush.msra.mxu0 0.0
        %1583 = vmatpush.msra.mxu0 0.0
        %1584 = vmatpush.msra.mxu0 0.0
        %1585 = vmatpush.msra.mxu0 0.0
        %1586 = vmatpush.msra.mxu0 0.0
        %1587 = vmatpush.msra.mxu0 0.0
        %1588 = vmatpush.msra.mxu0 %v1569
        %1589 = vmatmul.f32.gmra.mxu0 %v1567
        %v1590 = vpop.f32.mrf.mxu0
        %v1591 = vadd.f32 0.0, %v1590
        %1592 = vdwg.mxu0
        %1593 = vmatpush.msra.mxu0 0.0
        %1594 = vmatpush.msra.mxu0 0.0
        %1595 = vmatpush.msra.mxu0 0.0
        %1596 = vmatpush.msra.mxu0 0.0
        %1597 = vmatpush.msra.mxu0 0.0
        %1598 = vmatpush.msra.mxu0 0.0
        %1599 = vmatpush.msra.mxu0 0.0
        %1600 = vmatpush.msra.mxu0 0.0
        %1601 = vmatpush.msra.mxu0 0.0
        %1602 = vmatpush.msra.mxu0 0.0
        %1603 = vmatpush.msra.mxu0 0.0
        %1604 = vmatpush.msra.mxu0 0.0
        %1605 = vmatpush.msra.mxu0 0.0
        %1606 = vmatpush.msra.mxu0 0.0
        %1607 = vmatpush.msra.mxu0 0.0
        %1608 = vmatpush.msra.mxu0 %v1571
        %1609 = vmatmul.f32.gmra.mxu0 %v1567
        %v1610 = vpop.f32.mrf.mxu0
        %v1611 = vadd.f32 0.0, %v1610
        %1612 = vdwg.mxu0
        %v1613 = vadd.f32 %v1557, %v1591
        %v1614 = vadd.f32 %v1558, %v1611
        %v1615 = vrot.slane %v323, 7
        %v1616 = vrot.slane %v343, 7
        %v1619 = vmul.f32 %v323, %v1615
        %v1620 = vmul.f32 %v343, %v1616
        %v1621 = vmul.f32 %v1619, %v323
        %v1622 = vmul.f32 %v1620, %v343
        %1623 = vset.pattern.permute.xlu0 82
        %1624 = vperm.xlu0 %1623, %v197
        %v1625 = vpop.permute.xlu0 %1624
        %v1627 = vperm.slane %v1621, 5
        %v1628 = vperm.slane %v1622, 5
        %v1629 = vmul.f32 %v1625, %v1627
        %v1630 = vmul.f32 %v1625, %v1628
        %v1631 = vadd.f32 %v1613, %v1629
        %v1632 = vadd.f32 %v1614, %v1630
        %v1633 = vmul.f32 %v691, %v323
        %v1634 = vmul.f32 %v692, %v343
        %1635 = vset.pattern.permute.xlu0 83
        %1636 = vperm.xlu0 %1635, %v197
        %v1637 = vpop.permute.xlu0 %1636
        %v1639 = vperm.slane %v1633, 5
        %v1640 = vperm.slane %v1634, 5
        %v1641 = vmul.f32 %v1637, %v1639
        %v1642 = vmul.f32 %v1637, %v1640
        %v1643 = vadd.f32 %v1631, %v1641
        %v1644 = vadd.f32 %v1632, %v1642
        %v1645 = vand.u32 2147483647, %v323
        %vm1646 = vcmp.le.f32.partialorder %v1645, 0.7853982
        %vm1647 = vcmp.lt.s32.totalorder %v323, 0
        %v1648 = vand.u32 %v323, 2139095040
        %v1649 = vshrl.u32 %v1648, 23
        %v1650 = vsub.s32 %v1649, 127
        %v1651 = vand.u32 2147483647, %v323
        %v1652 = vand.u32 %v1651, 8388607
        %v1653 = vor.u32 %v1652, 8388608
        %v1654 = vsub.s32 0, %v1653
        %v1655 = vadd.s32 %v1650, 1
        %vm1656 = vcmp.gt.s32.totalorder %v1655, 0
        %v1657 = vsel %vm1656, %v1655, 0
        %v1658 = vshrl.u32 %v1657, 5
        %v1659 = vand.u32 %v1657, 31
        %v1660 = vsub.s32 32, %v1659
        %v1661 = vshrl.u32 683565275, %v1660
        %v1662 = vshll.u32 683565275, %v1659
        %v1663 = vshrl.u32 2475754826, %v1660
        %v1664 = vor.u32 %v1662, %v1663
        %v1665 = vshll.u32 2475754826, %v1659
        %v1666 = vshrl.u32 2131351028, %v1660
        %v1667 = vor.u32 %v1665, %v1666
        %v1668 = vshll.u32 2131351028, %v1659
        %v1669 = vshrl.u32 2102212464, %v1660
        %v1670 = vor.u32 %v1668, %v1669
        %v1671 = vshll.u32 2102212464, %v1659
        %v1672 = vshrl.u32 920167782, %v1660
        %v1673 = vor.u32 %v1671, %v1672
        %v1674 = vshll.u32 920167782, %v1659
        %v1675 = vshrl.u32 1326507024, %v1660
        %v1676 = vor.u32 %v1674, %v1675
        %vm1677 = vcmp.lt.s32.totalorder %v1658, 1
        %vm1678 = vcmp.lt.s32.totalorder %v1658, 2
        %vm1679 = vcmp.lt.s32.totalorder %v1658, 3
        %vm1680 = vcmp.lt.s32.totalorder %v1658, 4
        %v1681 = vsel %vm1677, %v1661, %v1664
        %v1682 = vsel %vm1680, %v1670, 2102212464
        %v1683 = vsel %vm1679, %v1667, %v1682
        %v1684 = vsel %vm1678, %v1681, %v1683
        %v1685 = vsel %vm1677, %v1664, %v1667
        %v1686 = vsel %vm1680, %v1673, 920167782
        %v1687 = vsel %vm1679, %v1670, %v1686
        %v1688 = vsel %vm1678, %v1685, %v1687
        %v1689 = vsel %vm1677, %v1667, %v1670
        %v1690 = vsel %vm1680, %v1676, 1326507024
        %v1691 = vsel %vm1679, %v1673, %v1690
        %v1692 = vsel %vm1678, %v1689, %v1691
        %v1693 = vshll.u32 %v1653, 8
        %v1694 = vand.u32 %v1693, 65535
        %v1695 = vshrl.u32 %v1693, 16
        %v1696 = vand.u32 %v1692, 65535
        %v1697 = vshrl.u32 %v1692, 16
        %v1698 = vmul.u32 %v1694, %v1696
        %v1699 = vmul.u32 %v1694, %v1697
        %v1700 = vmul.u32 %v1695, %v1696
        %v1701 = vmul.u32 %v1695, %v1697
        %v1702 = vshll.u32 %v1699, 16
        %v1703 = vshrl.u32 %v1699, 16
        %v1704 = vshll.u32 %v1700, 16
        %v1705 = vshrl.u32 %v1700, 16
        %vm1706 = vc.u32 %v1698, %v1702
        %v1707 = vsel %vm1706, 1, 0
        %v1708 = vadd.s32 %v1698, %v1702
        %v1709 = vadd.s32 %v1701, %v1707
        %vm1710 = vc.u32 %v1708, %v1704
        %v1711 = vsel %vm1710, 1, 0
        %v1712 = vadd.s32 %v1708, %v1704
        %v1713 = vadd.s32 %v1709, %v1711
        %v1714 = vadd.s32 %v1713, %v1703
        %v1715 = vadd.s32 %v1714, %v1705
        %v1716 = vand.u32 %v1693, 65535
        %v1717 = vshrl.u32 %v1693, 16
        %v1718 = vand.u32 %v1688, 65535
        %v1719 = vshrl.u32 %v1688, 16
        %v1720 = vmul.u32 %v1716, %v1718
        %v1721 = vmul.u32 %v1716, %v1719
        %v1722 = vmul.u32 %v1717, %v1718
        %v1723 = vmul.u32 %v1717, %v1719
        %v1724 = vshll.u32 %v1721, 16
        %v1725 = vshrl.u32 %v1721, 16
        %v1726 = vshll.u32 %v1722, 16
        %v1727 = vshrl.u32 %v1722, 16
        %vm1728 = vc.u32 %v1720, %v1724
        %v1729 = vsel %vm1728, 1, 0
        %v1730 = vadd.s32 %v1720, %v1724
        %v1731 = vadd.s32 %v1723, %v1729
        %vm1732 = vc.u32 %v1730, %v1726
        %v1733 = vsel %vm1732, 1, 0
        %v1734 = vadd.s32 %v1730, %v1726
        %v1735 = vadd.s32 %v1731, %v1733
        %v1736 = vadd.s32 %v1735, %v1725
        %v1737 = vadd.s32 %v1736, %v1727
        %v1738 = vmul.u32 %v1693, %v1684
        %v1739 = vadd.s32 %v1715, %v1734
        %vm1740 = vc.u32 %v1715, %v1734
        %v1741 = vadd.s32 %v1737, 1
        %v1742 = vsel %vm1740, %v1741, %v1737
        %v1743 = vadd.s32 %v1738, %v1742
        %v1744 = vadd.s32 %v1743, 536870912
        %v1745 = vshrl.u32 %v1744, 30
        %v1746 = vshll.u32 %v1745, 30
        %v1747 = vsub.s32 %v1743, %v1746
        %vm1748 = vcmp.lt.s32.totalorder %v1747, 0
        %v1749 = vsub.s32 0, %v1747
        %v1750 = vsel %vm1748, %v1749, %v1747
        %v1751 = vclz %v1750
        %v1752 = vsub.s32 %v1751, 2
        %vm1753 = vcmp.gt.s32.totalorder 0, %v1752
        %v1754 = vsel %vm1753, 0, %v1752
        %v1755 = vsub.s32 32, %v1754
        %v1756 = vshll.u32 %v1747, %v1754
        %v1757 = vshrl.u32 %v1739, %v1755
        %v1758 = vor.u32 %v1756, %v1757
        %v1759 = vsub.s32 4294967266, %v1754
        %v1760 = vadd.s32 %v1759, 127
        %v1761 = vshll.u32 %v1760, 23
        %v1762 = vor.u32 4788187, %v1761
        %v1763 = vand.u32 2147483647, %v1762
        %v1765 = vcvt.s32.f32 %v1758
        %v1766 = vmul.f32 %v1765, %v1763
        %v1767 = vxor.u32 %v1766, 2147483648
        %v1768 = vsel %vm1647, %v1767, %v1766
        %v1769 = vsub.s32 4, %v1745
        %v1770 = vsel %vm1647, %v1769, %v1745
        %v1771 = vsel %vm1646, %v323, %v1768
        %v1772 = vsel %vm1646, 0, %v1770
        %v1773 = vmul.f32 %v1771, %v1771
        %v1774 = vmul.f32 %v1773, -0.001358992
        %v1775 = vadd.f32 %v1774, 0.041655596
        %v1776 = vmul.f32 %v1773, %v1775
        %v1777 = vadd.f32 %v1776, -0.4999988
        %v1778 = vmul.f32 %v1773, %v1777
        %v1779 = vadd.f32 1.0, %v1778
        %v1780 = vmul.f32 %v1771, %v1771
        %v1781 = vmul.f32 %v1780, -0.00019511016
        %v1782 = vadd.f32 %v1781, 0.008332121
        %v1783 = vmul.f32 %v1780, %v1782
        %v1784 = vadd.f32 %v1783, -0.16666654
        %v1785 = vmul.f32 %v1780, %v1784
        %v1786 = vadd.f32 %v1785, 1.0
        %v1787 = vmul.f32 %v1786, %v1771
        %vm1788 = vweird.f32 %v323
        %v1789 = vadd.s32 %v1772, 3
        %v1790 = vand.u32 %v1789, 3
        %vm1791 = vcmp.lt.s32.totalorder %v1790, 2
        %vm1792 = vcmp.eq.s32.totalorder %v1790, 0
        %v1793 = vxor.u32 %v1787, 2147483648
        %v1794 = vsel %vm1792, %v1779, %v1793
        %vm1795 = vcmp.eq.s32.totalorder %v1790, 2
        %v1796 = vxor.u32 %v1779, 2147483648
        %v1797 = vsel %vm1795, %v1796, %v1787
        %v1798 = vsel %vm1791, %v1794, %v1797
        %v1799 = vsel %vm1788, nan, %v1798
        %v1800 = vand.u32 2147483647, %v343
        %vm1801 = vcmp.le.f32.partialorder %v1800, 0.7853982
        %vm1802 = vcmp.lt.s32.totalorder %v343, 0
        %v1803 = vand.u32 %v343, 2139095040
        %v1804 = vshrl.u32 %v1803, 23
        %v1805 = vsub.s32 %v1804, 127
        %v1806 = vand.u32 2147483647, %v343
        %v1807 = vand.u32 %v1806, 8388607
        %v1808 = vor.u32 %v1807, 8388608
        %v1809 = vsub.s32 0, %v1808
        %v1810 = vadd.s32 %v1805, 1
        %vm1811 = vcmp.gt.s32.totalorder %v1810, 0
        %v1812 = vsel %vm1811, %v1810, 0
        %v1813 = vshrl.u32 %v1812, 5
        %v1814 = vand.u32 %v1812, 31
        %v1815 = vsub.s32 32, %v1814
        %v1816 = vshrl.u32 683565275, %v1815
        %v1817 = vshll.u32 683565275, %v1814
        %v1818 = vshrl.u32 2475754826, %v1815
        %v1819 = vor.u32 %v1817, %v1818
        %v1820 = vshll.u32 2475754826, %v1814
        %v1821 = vshrl.u32 2131351028, %v1815
        %v1822 = vor.u32 %v1820, %v1821
        %v1823 = vshll.u32 2131351028, %v1814
        %v1824 = vshrl.u32 2102212464, %v1815
        %v1825 = vor.u32 %v1823, %v1824
        %v1826 = vshll.u32 2102212464, %v1814
        %v1827 = vshrl.u32 920167782, %v1815
        %v1828 = vor.u32 %v1826, %v1827
        %v1829 = vshll.u32 920167782, %v1814
        %v1830 = vshrl.u32 1326507024, %v1815
        %v1831 = vor.u32 %v1829, %v1830
        %vm1832 = vcmp.lt.s32.totalorder %v1813, 1
        %vm1833 = vcmp.lt.s32.totalorder %v1813, 2
        %vm1834 = vcmp.lt.s32.totalorder %v1813, 3
        %vm1835 = vcmp.lt.s32.totalorder %v1813, 4
        %v1836 = vsel %vm1832, %v1816, %v1819
        %v1837 = vsel %vm1835, %v1825, 2102212464
        %v1838 = vsel %vm1834, %v1822, %v1837
        %v1839 = vsel %vm1833, %v1836, %v1838
        %v1840 = vsel %vm1832, %v1819, %v1822
        %v1841 = vsel %vm1835, %v1828, 920167782
        %v1842 = vsel %vm1834, %v1825, %v1841
        %v1843 = vsel %vm1833, %v1840, %v1842
        %v1844 = vsel %vm1832, %v1822, %v1825
        %v1845 = vsel %vm1835, %v1831, 1326507024
        %v1846 = vsel %vm1834, %v1828, %v1845
        %v1847 = vsel %vm1833, %v1844, %v1846
        %v1848 = vshll.u32 %v1808, 8
        %v1849 = vand.u32 %v1848, 65535
        %v1850 = vshrl.u32 %v1848, 16
        %v1851 = vand.u32 %v1847, 65535
        %v1852 = vshrl.u32 %v1847, 16
        %v1853 = vmul.u32 %v1849, %v1851
        %v1854 = vmul.u32 %v1849, %v1852
        %v1855 = vmul.u32 %v1850, %v1851
        %v1856 = vmul.u32 %v1850, %v1852
        %v1857 = vshll.u32 %v1854, 16
        %v1858 = vshrl.u32 %v1854, 16
        %v1859 = vshll.u32 %v1855, 16
        %v1860 = vshrl.u32 %v1855, 16
        %vm1861 = vc.u32 %v1853, %v1857
        %v1862 = vsel %vm1861, 1, 0
        %v1863 = vadd.s32 %v1853, %v1857
        %v1864 = vadd.s32 %v1856, %v1862
        %vm1865 = vc.u32 %v1863, %v1859
        %v1866 = vsel %vm1865, 1, 0
        %v1867 = vadd.s32 %v1863, %v1859
        %v1868 = vadd.s32 %v1864, %v1866
        %v1869 = vadd.s32 %v1868, %v1858
        %v1870 = vadd.s32 %v1869, %v1860
        %v1871 = vand.u32 %v1848, 65535
        %v1872 = vshrl.u32 %v1848, 16
        %v1873 = vand.u32 %v1843, 65535
        %v1874 = vshrl.u32 %v1843, 16
        %v1875 = vmul.u32 %v1871, %v1873
        %v1876 = vmul.u32 %v1871, %v1874
        %v1877 = vmul.u32 %v1872, %v1873
        %v1878 = vmul.u32 %v1872, %v1874
        %v1879 = vshll.u32 %v1876, 16
        %v1880 = vshrl.u32 %v1876, 16
        %v1881 = vshll.u32 %v1877, 16
        %v1882 = vshrl.u32 %v1877, 16
        %vm1883 = vc.u32 %v1875, %v1879
        %v1884 = vsel %vm1883, 1, 0
        %v1885 = vadd.s32 %v1875, %v1879
        %v1886 = vadd.s32 %v1878, %v1884
        %vm1887 = vc.u32 %v1885, %v1881
        %v1888 = vsel %vm1887, 1, 0
        %v1889 = vadd.s32 %v1885, %v1881
        %v1890 = vadd.s32 %v1886, %v1888
        %v1891 = vadd.s32 %v1890, %v1880
        %v1892 = vadd.s32 %v1891, %v1882
        %v1893 = vmul.u32 %v1848, %v1839
        %v1894 = vadd.s32 %v1870, %v1889
        %vm1895 = vc.u32 %v1870, %v1889
        %v1896 = vadd.s32 %v1892, 1
        %v1897 = vsel %vm1895, %v1896, %v1892
        %v1898 = vadd.s32 %v1893, %v1897
        %v1899 = vadd.s32 %v1898, 536870912
        %v1900 = vshrl.u32 %v1899, 30
        %v1901 = vshll.u32 %v1900, 30
        %v1902 = vsub.s32 %v1898, %v1901
        %vm1903 = vcmp.lt.s32.totalorder %v1902, 0
        %v1904 = vsub.s32 0, %v1902
        %v1905 = vsel %vm1903, %v1904, %v1902
        %v1906 = vclz %v1905
        %v1907 = vsub.s32 %v1906, 2
        %vm1908 = vcmp.gt.s32.totalorder 0, %v1907
        %v1909 = vsel %vm1908, 0, %v1907
        %v1910 = vsub.s32 32, %v1909
        %v1911 = vshll.u32 %v1902, %v1909
        %v1912 = vshrl.u32 %v1894, %v1910
        %v1913 = vor.u32 %v1911, %v1912
        %v1914 = vsub.s32 4294967266, %v1909
        %v1915 = vadd.s32 %v1914, 127
        %v1916 = vshll.u32 %v1915, 23
        %v1917 = vor.u32 4788187, %v1916
        %v1918 = vand.u32 2147483647, %v1917
        %v1920 = vcvt.s32.f32 %v1913
        %v1921 = vmul.f32 %v1920, %v1918
        %v1922 = vxor.u32 %v1921, 2147483648
        %v1923 = vsel %vm1802, %v1922, %v1921
        %v1924 = vsub.s32 4, %v1900
        %v1925 = vsel %vm1802, %v1924, %v1900
        %v1926 = vsel %vm1801, %v343, %v1923
        %v1927 = vsel %vm1801, 0, %v1925
        %v1928 = vmul.f32 %v1926, %v1926
        %v1929 = vmul.f32 %v1928, -0.001358992
        %v1930 = vadd.f32 %v1929, 0.041655596
        %v1931 = vmul.f32 %v1928, %v1930
        %v1932 = vadd.f32 %v1931, -0.4999988
        %v1933 = vmul.f32 %v1928, %v1932
        %v1934 = vadd.f32 1.0, %v1933
        %v1935 = vmul.f32 %v1926, %v1926
        %v1936 = vmul.f32 %v1935, -0.00019511016
        %v1937 = vadd.f32 %v1936, 0.008332121
        %v1938 = vmul.f32 %v1935, %v1937
        %v1939 = vadd.f32 %v1938, -0.16666654
        %v1940 = vmul.f32 %v1935, %v1939
        %v1941 = vadd.f32 %v1940, 1.0
        %v1942 = vmul.f32 %v1941, %v1926
        %vm1943 = vweird.f32 %v343
        %v1944 = vadd.s32 %v1927, 3
        %v1945 = vand.u32 %v1944, 3
        %vm1946 = vcmp.lt.s32.totalorder %v1945, 2
        %vm1947 = vcmp.eq.s32.totalorder %v1945, 0
        %v1948 = vxor.u32 %v1942, 2147483648
        %v1949 = vsel %vm1947, %v1934, %v1948
        %vm1950 = vcmp.eq.s32.totalorder %v1945, 2
        %v1951 = vxor.u32 %v1934, 2147483648
        %v1952 = vsel %vm1950, %v1951, %v1942
        %v1953 = vsel %vm1946, %v1949, %v1952
        %v1954 = vsel %vm1943, nan, %v1953
        %1955 = vrot.lane.b32.xlu0 %v197, 44
        %v1956 = vpop.permute.xlu0 %1955
        %v1957 = vsel %vm205, %v1956, 0
        %v1960 = vsel %vm402, %v1799, 0
        %v1963 = vsel %vm402, %v1954, 0
        %1965 = vmatpush.msra.mxu0 0.0
        %1966 = vmatpush.msra.mxu0 0.0
        %1967 = vmatpush.msra.mxu0 0.0
        %1968 = vmatpush.msra.mxu0 0.0
        %1969 = vmatpush.msra.mxu0 0.0
        %1970 = vmatpush.msra.mxu0 0.0
        %1971 = vmatpush.msra.mxu0 0.0
        %1972 = vmatpush.msra.mxu0 0.0
        %1973 = vmatpush.msra.mxu0 0.0
        %1974 = vmatpush.msra.mxu0 0.0
        %1975 = vmatpush.msra.mxu0 0.0
        %1976 = vmatpush.msra.mxu0 0.0
        %1977 = vmatpush.msra.mxu0 0.0
        %1978 = vmatpush.msra.mxu0 0.0
        %1979 = vmatpush.msra.mxu0 0.0
        %1980 = vmatpush.msra.mxu0 %v1960
        %1981 = vmatmul.f32.gmra.mxu0 %v1957
        %v1982 = vpop.f32.mrf.mxu0
        %v1983 = vadd.f32 0.0, %v1982
        %1984 = vdwg.mxu0
        %1985 = vmatpush.msra.mxu0 0.0
        %1986 = vmatpush.msra.mxu0 0.0
        %1987 = vmatpush.msra.mxu0 0.0
        %1988 = vmatpush.msra.mxu0 0.0
        %1989 = vmatpush.msra.mxu0 0.0
        %1990 = vmatpush.msra.mxu0 0.0
        %1991 = vmatpush.msra.mxu0 0.0
        %1992 = vmatpush.msra.mxu0 0.0
        %1993 = vmatpush.msra.mxu0 0.0
        %1994 = vmatpush.msra.mxu0 0.0
        %1995 = vmatpush.msra.mxu0 0.0
        %1996 = vmatpush.msra.mxu0 0.0
        %1997 = vmatpush.msra.mxu0 0.0
        %1998 = vmatpush.msra.mxu0 0.0
        %1999 = vmatpush.msra.mxu0 0.0
        %2000 = vmatpush.msra.mxu0 %v1963
        %2001 = vmatmul.f32.gmra.mxu0 %v1957
        %v2002 = vpop.f32.mrf.mxu0
        %v2003 = vadd.f32 0.0, %v2002
        %2004 = vdwg.mxu0
        %v2005 = vadd.f32 %v1643, %v1983
        %v2006 = vadd.f32 %v1644, %v2003
        %v2007 = vadd.f32 %v323, %v2005
        %v2008 = vadd.f32 %v343, %v2006
        %2009 = vst [vmem:[%s149] sm:$0x3f] %v2007
        %2010 = vst [vmem:[%s149 + $0x8] sm:$0x3f] %v2008
        %s2011 = sand.u32 %s71, 1
        %s2012 = scalar_lea.sflag [#allocation3], %s2011
        %s2013 = sand.u32 %s71, 1
        %s2014 = smul.addr %s2013, 16
        %s2015 = scalar_lea.vmem [#allocation2], %s2014
        // Predicated region
        $region29: #{tpu_custom_call.1} parent=27 // pred_check
          %p2016 = pneg %p81
        $region30: #{tpu_custom_call.1} parent=27 // pred_check_branch
          %2018 = sbr.rel (%p2016) target = $region32
        $region31: #{tpu_custom_call.1} parent=27 // pred_region
          %s2019 = smul.u32 2, %s16
          %2021 = vsyncadd %s2012, 0
          %s2022 = smul.addr %s2019, 8
          %s2023 = scalar_lea.hbm %s2, %s2022
          %s2025 = sshll.u32 %s2015, 4
          %s2026 = int_to_ptr.vmem [resolvable:$true] %s2025
          %s2027 = sshll.u32 %s2023, 4
          %s2028 = int_to_ptr.hbm [resolvable:$true] %s2027
          %2030 = dma.vmem_to_hbm [thread:$0]  %s2026, 256, %s2028, %s2012
        $region32: #{tpu_custom_call.1} parent=27 // pred_fallthru
          _
      $region28: #{tpu_custom_call.1} parent=5 // pred_fallthru
        _
      %p2031 = scmp.le.s32.totalorder 2, %s11
      // Predicated region
      $region33: #{tpu_custom_call.1} parent=5 // pred_check
        %p2032 = pneg %p2031
      $region34: #{tpu_custom_call.1} parent=5 // pred_check_branch
        %2034 = sbr.rel (%p2032) target = $region36
      $region35: #{tpu_custom_call.1} parent=5 // pred_region
        %s2035 = ssub.s32 %s11, 2
        // Predicated region
        $region37: #{tpu_custom_call.1} parent=35 // pred_check
          %p2036 = pneg %p87
        $region38: #{tpu_custom_call.1} parent=35 // pred_check_branch
          %2038 = sbr.rel (%p2036) target = $region40
        $region39: #{tpu_custom_call.1} parent=35 // pred_region
          %s2039 = sand.u32 %s72, 1
          %s2040 = scalar_lea.sflag [#allocation3], %s2039
          %s2041 = sand.u32 %s72, 1
          %s2042 = smul.addr %s2041, 16
          %s2043 = scalar_lea.vmem [#allocation2], %s2042
          %2045 = dma.done %s2040, 256
        $region40: #{tpu_custom_call.1} parent=35 // pred_fallthru
          _
      $region36: #{tpu_custom_call.1} parent=5 // pred_fallthru
        _
    $region6: #{tpu_custom_call.1} parent=1 // loop_footer
      %s15 = sadd.s32 1, %s11
    $region7: #{tpu_custom_call.1} parent=1 // loop_footer_branch
      %10 = sbr.rel target = $region3
    $region8: #{tpu_custom_call.1} parent=1 // loop_exit
      _
    %2046 = vsyncpa [#allocation3], 1
    %s2047 = scalar_lea.sflag [#allocation3], 1
    %2048 = vsyncpa %s2047, 1

</llo_original>
